<compile_context>
chip_gen: v7x
topology: tpu7x:2x2x1
jax: 0.10.0
libtpu: 0.0.40
codegen_flags: <defaults>
</compile_context>

<pallas_src>
import jax
import jax.numpy as jnp
from jax import lax
from jax.experimental import pallas as pl
from jax.experimental.pallas import tpu as pltpu

HIDDEN = 64
NUM_LAYERS = 4


def rnn_wavefront_kernel(tok_ref, emb_ref, wih0_ref, wcomb_ref, b_ref,
                         wc_ref, bc_ref, feat_ref, out_ref):
    """Fused embedding + wavefront multi-layer tanh RNN + time-sum + classifier.

    tok_ref  : (S*B, 1) int32  token ids, seq-major flattening of (seq, batch)
    emb_ref  : (V, H)          embedding table (row 0 zero: padding_idx=0)
    wih0_ref : (H, L*H)        [W_ih^0.T | 0 ...]  layer-0 projection, lane-padded
    wcomb_ref: (L*H, L*H)      block-bidiagonal: diag = W_hh^l.T, super-diag = W_ih^{l+1}.T
    b_ref    : (1, L*H)        per-layer biases (b_ih + b_hh), concatenated
    wc_ref   : (L*H, Cpad)     classifier weight; only last-layer block rows non-zero
    bc_ref   : (1, Cpad)       classifier bias, lane-padded
    feat_ref : (B, L*H)        packed time-sum (last block = the real feature)
    out_ref  : (B, Cpad)       lane-dense logits (first num_classes lanes valid)
    """
    sb = tok_ref.shape[0]
    vocab = emb_ref.shape[0]
    batch = out_ref.shape[0]
    seq = sb // batch
    lh = wcomb_ref.shape[0]               # L * H
    n_layers = lh // HIDDEN
    n_diag = seq + n_layers - 1           # wavefront length

    # ---- fused embedding: one-hot (S*B, V) @ (V, H) on the MXU -------------
    # TODO(synk): for large vocabularies switch to a scalar-prefetched row
    # gather from an HBM-resident table instead of the one-hot matmul.
    toks = tok_ref[...]                                             # (S*B, 1) i32
    onehot = (toks == lax.broadcasted_iota(jnp.int32, (sb, vocab), 1)
              ).astype(jnp.float32)                                 # (S*B, V)
    x = jnp.dot(onehot, emb_ref[...],
                preferred_element_type=jnp.float32)                 # (S*B, H)

    # ---- hoisted layer-0 input projection + biases, off the serial path ----
    # xb[t*B:(t+1)*B] = [ x_t @ W_ih^0.T + b_0 | b_1 | b_2 | b_3 ]
    xb = jnp.dot(x, wih0_ref[...],
                 preferred_element_type=jnp.float32) + b_ref[...]   # (S*B, L*H)

    lane = lax.broadcasted_iota(jnp.int32, (batch, lh), 1)

    # ---- wavefront recurrence: one 256-wide matmul per diagonal ------------
    # Packed state h: after diagonal d, block l holds h^l_{d-l}.  Finished
    # layers hold bounded tanh "garbage" that never feeds a valid cell;
    # not-yet-started layers are kept at zero by the lane mask below.
    h = jnp.zeros((batch, lh), jnp.float32)
    hsum = jnp.zeros((batch, lh), jnp.float32)
    for d in range(n_diag):  # tiny static trip count -> fully unrolled
        # TODO(synk): switch to lax.fori_loop(..., unroll=k) for long sequences.
        pre = jnp.dot(h, wcomb_ref[...], preferred_element_type=jnp.float32)
        if d < seq:
            pre = pre + xb[d * batch:(d + 1) * batch, :]            # drive layer 0
        else:
            pre = pre + b_ref[...]                                  # layer 0 done
        h_new = jnp.tanh(pre)
        if d < n_layers - 1:
            # layers l > d have not started yet; keep their blocks at zero
            h_new = jnp.where(lane < (d + 1) * HIDDEN, h_new, h)
        h = h_new
        if d >= n_layers - 1:
            hsum = hsum + h          # only the last-layer block is meaningful

    feat_ref[...] = hsum

    # ---- classifier: zero rows in wc_ref select the last-layer block -------
    out_ref[...] = (jnp.dot(hsum, wc_ref[...],
                            preferred_element_type=jnp.float32) + bc_ref[...])


def init_params(key, num_chars, num_classes):
    """Deterministic synthetic parameters (PyTorch-style uniform init)."""
    ks = jax.random.split(key, 3 + 4 * NUM_LAYERS)
    bound = 1.0 / jnp.sqrt(jnp.float32(HIDDEN))

    emb = jax.random.normal(ks[0], (num_chars, HIDDEN), jnp.float32)
    emb = emb.at[0].set(0.0)  # padding_idx=0 invariant

    wih_t, whh_t, bias = [], [], []
    for l in range(NUM_LAYERS):
        k0, k1, k2, k3 = ks[3 + 4 * l: 3 + 4 * l + 4]
        w_ih = jax.random.uniform(k0, (HIDDEN, HIDDEN), jnp.float32, -bound, bound)
        w_hh = jax.random.uniform(k1, (HIDDEN, HIDDEN), jnp.float32, -bound, bound)
        b_ih = jax.random.uniform(k2, (HIDDEN,), jnp.float32, -bound, bound)
        b_hh = jax.random.uniform(k3, (HIDDEN,), jnp.float32, -bound, bound)
        wih_t.append(w_ih.T)
        whh_t.append(w_hh.T)
        bias.append((b_ih + b_hh).reshape(1, HIDDEN))

    w_c = jax.random.uniform(ks[1], (num_classes, HIDDEN), jnp.float32, -bound, bound)
    b_c = jax.random.uniform(ks[2], (num_classes,), jnp.float32, -bound, bound)

    return dict(
        embedding=emb,
        wih_t=jnp.stack(wih_t),                  # (L, H, H)   x @ W_ih^T
        whh_t=jnp.stack(whh_t),                  # (L, H, H)   h @ W_hh^T
        b=jnp.stack(bias),                       # (L, 1, H)
        wc_t=w_c.T,                              # (H, C)
        bc=b_c.reshape(1, num_classes),          # (1, C)
    )


def pack_params(params, num_classes):
    """Pack per-layer weights into the wavefront / lane-dense kernel layout."""
    L, H = NUM_LAYERS, HIDDEN
    lh = L * H
    cpad = max(128, -(-num_classes // 128) * 128)

    # Block-bidiagonal combined weight: output block l gets
    #   h[block l-1] @ W_ih^l.T  +  h[block l] @ W_hh^l.T
    w_comb = jnp.zeros((lh, lh), jnp.float32)
    for l in range(L):
        w_comb = w_comb.at[l * H:(l + 1) * H, l * H:(l + 1) * H].set(params["whh_t"][l])
        if l >= 1:
            w_comb = w_comb.at[(l - 1) * H:l * H, l * H:(l + 1) * H].set(params["wih_t"][l])

    wih0_pad = jnp.zeros((H, lh), jnp.float32).at[:, :H].set(params["wih_t"][0])
    b_comb = params["b"].reshape(1, lh)                     # (1, L*H)

    wc_big = jnp.zeros((lh, cpad), jnp.float32)
    wc_big = wc_big.at[(L - 1) * H:, :num_classes].set(params["wc_t"])
    bc_pad = jnp.zeros((1, cpad), jnp.float32).at[:, :num_classes].set(params["bc"][0])

    return dict(embedding=params["embedding"], wih0_pad=wih0_pad, w_comb=w_comb,
                b_comb=b_comb, wc_big=wc_big, bc_pad=bc_pad, num_classes=num_classes)


def surface_forward(tokens, packed, *, feature_only=False):
    """tokens: int32 (seq, batch) -> logits (batch, C) or feature (batch, 64)."""
    seq, batch = tokens.shape
    lh = packed["w_comb"].shape[0]
    cpad = packed["wc_big"].shape[1]
    num_classes = packed["num_classes"]

    # seq-major flattening: timestep t occupies rows [t*batch, (t+1)*batch)
    tok_flat = tokens.astype(jnp.int32).reshape(seq * batch, 1)

    vmem = pl.BlockSpec(memory_space=pltpu.MemorySpace.VMEM)
    # TODO(synk): for non-toy batch sizes add a batch-tiled grid with
    # dimension_semantics=("parallel",) so both v7x TensorCores get work.
    feat_pack, logits_pad = pl.pallas_call(
        rnn_wavefront_kernel,
        out_shape=(jax.ShapeDtypeStruct((batch, lh), jnp.float32),
                   jax.ShapeDtypeStruct((batch, cpad), jnp.float32)),
        in_specs=[vmem] * 7,
        out_specs=(vmem, vmem),
    )(tok_flat, packed["embedding"], packed["wih0_pad"], packed["w_comb"],
      packed["b_comb"], packed["wc_big"], packed["bc_pad"])

    if feature_only:
        return feat_pack[:, lh - HIDDEN:]          # last-layer time-sum (B, 64)
    return logits_pad[:, :num_classes]


def surface_forward_ref(tokens, params):
    """Pure-JAX reference (standard stacked-RNN order) for correctness checking."""
    x = jnp.take(params["embedding"], tokens, axis=0)  # (seq, batch, H)
    seq, batch, _ = x.shape
    for l in range(NUM_LAYERS):
        h = jnp.zeros((batch, HIDDEN), jnp.float32)
        outs = []
        for t in range(seq):
            h = jnp.tanh(x[t] @ params["wih_t"][l]
                         + h @ params["whh_t"][l]
                         + params["b"][l])
            outs.append(h)
        x = jnp.stack(outs)
    feat = jnp.sum(x, axis=0)
    return feat @ params["wc_t"] + params["bc"], feat


if __name__ == "__main__":
    NUM_CHARS = 16
    NUM_CLASSES = 8
    SEQ, BATCH = 8, 2

    key = jax.random.PRNGKey(0)
    k_param, k_tok = jax.random.split(key)

    params = init_params(k_param, NUM_CHARS, NUM_CLASSES)
    packed = pack_params(params, NUM_CLASSES)
    tokens = jax.random.randint(k_tok, (SEQ, BATCH), 0, NUM_CHARS, dtype=jnp.int32)

    logits = jax.block_until_ready(surface_forward(tokens, packed))
    feat = jax.block_until_ready(surface_forward(tokens, packed, feature_only=True))

    ref_logits, ref_feat = surface_forward_ref(tokens, params)

    assert logits.shape == (BATCH, NUM_CLASSES)
    assert feat.shape == (BATCH, HIDDEN)
    assert jnp.allclose(logits, ref_logits, atol=1e-4, rtol=1e-4), "logits mismatch"
    assert jnp.allclose(feat, ref_feat, atol=1e-4, rtol=1e-4), "feature mismatch"

    print("KERNEL_OK")
</pallas_src>

<mosaic_0001>
module attributes {stable_mosaic.version = 11 : i64} {
  func.func @rnn_wavefront_kernel(%arg0: memref<16x1xi32, #tpu.memory_space<vmem>>, %arg1: memref<16x64xf32, #tpu.memory_space<vmem>>, %arg2: memref<64x256xf32, #tpu.memory_space<vmem>>, %arg3: memref<256x256xf32, #tpu.memory_space<vmem>>, %arg4: memref<1x256xf32, #tpu.memory_space<vmem>>, %arg5: memref<256x128xf32, #tpu.memory_space<vmem>>, %arg6: memref<1x128xf32, #tpu.memory_space<vmem>>, %arg7: memref<2x256xf32, #tpu.memory_space<vmem>>, %arg8: memref<2x128xf32, #tpu.memory_space<vmem>>) attributes {dimension_semantics = [], scalar_prefetch = 0 : i64, scratch_operands = 0 : i64, tpu.core_type = #tpu.core_type<tc>} {
    %c0 = arith.constant 0 : index
    %c0_0 = arith.constant 0 : index
    %0 = vector.load %arg0[%c0, %c0_0] : memref<16x1xi32, #tpu.memory_space<vmem>>, vector<16x1xi32>
    %1 = tpu.iota {dimensions = array<i32: 1>} : vector<16x16xi32>
    %2 = vector.broadcast %0 : vector<16x1xi32> to vector<16x16xi32>
    %3 = arith.cmpi eq, %2, %1 : vector<16x16xi32>
    %4 = arith.extui %3 : vector<16x16xi1> to vector<16x16xi32>
    %5 = arith.sitofp %4 : vector<16x16xi32> to vector<16x16xf32>
    %c0_1 = arith.constant 0 : index
    %c0_2 = arith.constant 0 : index
    %6 = vector.load %arg1[%c0_1, %c0_2] : memref<16x64xf32, #tpu.memory_space<vmem>>, vector<16x64xf32>
    %cst = arith.constant dense<0.000000e+00> : vector<16x64xf32>
    %7 = tpu.matmul %5, %6, %cst {dimension_numbers = #tpu.dot_dimension_numbers<[1], [0], [0], [1], [0, 0, 1, 1], [], []>} : vector<16x16xf32>, vector<16x64xf32>, vector<16x64xf32> -> vector<16x64xf32>
    %c0_3 = arith.constant 0 : index
    %c0_4 = arith.constant 0 : index
    %8 = vector.load %arg2[%c0_3, %c0_4] : memref<64x256xf32, #tpu.memory_space<vmem>>, vector<64x256xf32>
    %cst_5 = arith.constant dense<0.000000e+00> : vector<16x256xf32>
    %9 = tpu.matmul %7, %8, %cst_5 {dimension_numbers = #tpu.dot_dimension_numbers<[1], [0], [0], [1], [0, 0, 1, 1], [], []>} : vector<16x64xf32>, vector<64x256xf32>, vector<16x256xf32> -> vector<16x256xf32>
    %c0_6 = arith.constant 0 : index
    %c0_7 = arith.constant 0 : index
    %10 = vector.load %arg4[%c0_6, %c0_7] : memref<1x256xf32, #tpu.memory_space<vmem>>, vector<1x256xf32>
    %11 = vector.broadcast %10 : vector<1x256xf32> to vector<16x256xf32>
    %12 = arith.addf %9, %11 : vector<16x256xf32>
    %13 = tpu.iota {dimensions = array<i32: 1>} : vector<2x256xi32>
    %cst_8 = arith.constant 0.000000e+00 : f32
    %14 = vector.broadcast %cst_8 : f32 to vector<2x256xf32>
    %cst_9 = arith.constant 0.000000e+00 : f32
    %15 = vector.broadcast %cst_9 : f32 to vector<2x256xf32>
    %c0_10 = arith.constant 0 : index
    %c0_11 = arith.constant 0 : index
    %16 = vector.load %arg3[%c0_10, %c0_11] : memref<256x256xf32, #tpu.memory_space<vmem>>, vector<256x256xf32>
    %cst_12 = arith.constant dense<0.000000e+00> : vector<2x256xf32>
    %17 = tpu.matmul %14, %16, %cst_12 {dimension_numbers = #tpu.dot_dimension_numbers<[1], [0], [0], [1], [0, 0, 1, 1], [], []>} : vector<2x256xf32>, vector<256x256xf32>, vector<2x256xf32> -> vector<2x256xf32>
    %18 = vector.extract_strided_slice %12 {offsets = [0, 0], sizes = [2, 256], strides = [1, 1]} : vector<16x256xf32> to vector<2x256xf32>
    %19 = arith.addf %17, %18 : vector<2x256xf32>
    %20 = math.tanh %19 : vector<2x256xf32>
    %c64_i32 = arith.constant 64 : i32
    %21 = vector.broadcast %c64_i32 : i32 to vector<2x256xi32>
    %22 = arith.cmpi slt, %13, %21 : vector<2x256xi32>
    %23 = arith.select %22, %20, %14 : vector<2x256xi1>, vector<2x256xf32>
    %c0_13 = arith.constant 0 : index
    %c0_14 = arith.constant 0 : index
    %24 = vector.load %arg3[%c0_13, %c0_14] : memref<256x256xf32, #tpu.memory_space<vmem>>, vector<256x256xf32>
    %cst_15 = arith.constant dense<0.000000e+00> : vector<2x256xf32>
    %25 = tpu.matmul %23, %24, %cst_15 {dimension_numbers = #tpu.dot_dimension_numbers<[1], [0], [0], [1], [0, 0, 1, 1], [], []>} : vector<2x256xf32>, vector<256x256xf32>, vector<2x256xf32> -> vector<2x256xf32>
    %26 = vector.extract_strided_slice %12 {offsets = [2, 0], sizes = [2, 256], strides = [1, 1]} : vector<16x256xf32> to vector<2x256xf32>
    %27 = arith.addf %25, %26 : vector<2x256xf32>
    %28 = math.tanh %27 : vector<2x256xf32>
    %c128_i32 = arith.constant 128 : i32
    %29 = vector.broadcast %c128_i32 : i32 to vector<2x256xi32>
    %30 = arith.cmpi slt, %13, %29 : vector<2x256xi32>
    %31 = arith.select %30, %28, %23 : vector<2x256xi1>, vector<2x256xf32>
    %c0_16 = arith.constant 0 : index
    %c0_17 = arith.constant 0 : index
    %32 = vector.load %arg3[%c0_16, %c0_17] : memref<256x256xf32, #tpu.memory_space<vmem>>, vector<256x256xf32>
    %cst_18 = arith.constant dense<0.000000e+00> : vector<2x256xf32>
    %33 = tpu.matmul %31, %32, %cst_18 {dimension_numbers = #tpu.dot_dimension_numbers<[1], [0], [0], [1], [0, 0, 1, 1], [], []>} : vector<2x256xf32>, vector<256x256xf32>, vector<2x256xf32> -> vector<2x256xf32>
    %34 = vector.extract_strided_slice %12 {offsets = [4, 0], sizes = [2, 256], strides = [1, 1]} : vector<16x256xf32> to vector<2x256xf32>
    %35 = arith.addf %33, %34 : vector<2x256xf32>
    %36 = math.tanh %35 : vector<2x256xf32>
    %c192_i32 = arith.constant 192 : i32
    %37 = vector.broadcast %c192_i32 : i32 to vector<2x256xi32>
    %38 = arith.cmpi slt, %13, %37 : vector<2x256xi32>
    %39 = arith.select %38, %36, %31 : vector<2x256xi1>, vector<2x256xf32>
    %c0_19 = arith.constant 0 : index
    %c0_20 = arith.constant 0 : index
    %40 = vector.load %arg3[%c0_19, %c0_20] : memref<256x256xf32, #tpu.memory_space<vmem>>, vector<256x256xf32>
    %cst_21 = arith.constant dense<0.000000e+00> : vector<2x256xf32>
    %41 = tpu.matmul %39, %40, %cst_21 {dimension_numbers = #tpu.dot_dimension_numbers<[1], [0], [0], [1], [0, 0, 1, 1], [], []>} : vector<2x256xf32>, vector<256x256xf32>, vector<2x256xf32> -> vector<2x256xf32>
    %42 = vector.extract_strided_slice %12 {offsets = [6, 0], sizes = [2, 256], strides = [1, 1]} : vector<16x256xf32> to vector<2x256xf32>
    %43 = arith.addf %41, %42 : vector<2x256xf32>
    %44 = math.tanh %43 : vector<2x256xf32>
    %45 = arith.addf %15, %44 : vector<2x256xf32>
    %c0_22 = arith.constant 0 : index
    %c0_23 = arith.constant 0 : index
    %46 = vector.load %arg3[%c0_22, %c0_23] : memref<256x256xf32, #tpu.memory_space<vmem>>, vector<256x256xf32>
    %cst_24 = arith.constant dense<0.000000e+00> : vector<2x256xf32>
    %47 = tpu.matmul %44, %46, %cst_24 {dimension_numbers = #tpu.dot_dimension_numbers<[1], [0], [0], [1], [0, 0, 1, 1], [], []>} : vector<2x256xf32>, vector<256x256xf32>, vector<2x256xf32> -> vector<2x256xf32>
    %48 = vector.extract_strided_slice %12 {offsets = [8, 0], sizes = [2, 256], strides = [1, 1]} : vector<16x256xf32> to vector<2x256xf32>
    %49 = arith.addf %47, %48 : vector<2x256xf32>
    %50 = math.tanh %49 : vector<2x256xf32>
    %51 = arith.addf %45, %50 : vector<2x256xf32>
    %c0_25 = arith.constant 0 : index
    %c0_26 = arith.constant 0 : index
    %52 = vector.load %arg3[%c0_25, %c0_26] : memref<256x256xf32, #tpu.memory_space<vmem>>, vector<256x256xf32>
    %cst_27 = arith.constant dense<0.000000e+00> : vector<2x256xf32>
    %53 = tpu.matmul %50, %52, %cst_27 {dimension_numbers = #tpu.dot_dimension_numbers<[1], [0], [0], [1], [0, 0, 1, 1], [], []>} : vector<2x256xf32>, vector<256x256xf32>, vector<2x256xf32> -> vector<2x256xf32>
    %54 = vector.extract_strided_slice %12 {offsets = [10, 0], sizes = [2, 256], strides = [1, 1]} : vector<16x256xf32> to vector<2x256xf32>
    %55 = arith.addf %53, %54 : vector<2x256xf32>
    %56 = math.tanh %55 : vector<2x256xf32>
    %57 = arith.addf %51, %56 : vector<2x256xf32>
    %c0_28 = arith.constant 0 : index
    %c0_29 = arith.constant 0 : index
    %58 = vector.load %arg3[%c0_28, %c0_29] : memref<256x256xf32, #tpu.memory_space<vmem>>, vector<256x256xf32>
    %cst_30 = arith.constant dense<0.000000e+00> : vector<2x256xf32>
    %59 = tpu.matmul %56, %58, %cst_30 {dimension_numbers = #tpu.dot_dimension_numbers<[1], [0], [0], [1], [0, 0, 1, 1], [], []>} : vector<2x256xf32>, vector<256x256xf32>, vector<2x256xf32> -> vector<2x256xf32>
    %60 = vector.extract_strided_slice %12 {offsets = [12, 0], sizes = [2, 256], strides = [1, 1]} : vector<16x256xf32> to vector<2x256xf32>
    %61 = arith.addf %59, %60 : vector<2x256xf32>
    %62 = math.tanh %61 : vector<2x256xf32>
    %63 = arith.addf %57, %62 : vector<2x256xf32>
    %c0_31 = arith.constant 0 : index
    %c0_32 = arith.constant 0 : index
    %64 = vector.load %arg3[%c0_31, %c0_32] : memref<256x256xf32, #tpu.memory_space<vmem>>, vector<256x256xf32>
    %cst_33 = arith.constant dense<0.000000e+00> : vector<2x256xf32>
    %65 = tpu.matmul %62, %64, %cst_33 {dimension_numbers = #tpu.dot_dimension_numbers<[1], [0], [0], [1], [0, 0, 1, 1], [], []>} : vector<2x256xf32>, vector<256x256xf32>, vector<2x256xf32> -> vector<2x256xf32>
    %66 = vector.extract_strided_slice %12 {offsets = [14, 0], sizes = [2, 256], strides = [1, 1]} : vector<16x256xf32> to vector<2x256xf32>
    %67 = arith.addf %65, %66 : vector<2x256xf32>
    %68 = math.tanh %67 : vector<2x256xf32>
    %69 = arith.addf %63, %68 : vector<2x256xf32>
    %c0_34 = arith.constant 0 : index
    %c0_35 = arith.constant 0 : index
    %70 = vector.load %arg3[%c0_34, %c0_35] : memref<256x256xf32, #tpu.memory_space<vmem>>, vector<256x256xf32>
    %cst_36 = arith.constant dense<0.000000e+00> : vector<2x256xf32>
    %71 = tpu.matmul %68, %70, %cst_36 {dimension_numbers = #tpu.dot_dimension_numbers<[1], [0], [0], [1], [0, 0, 1, 1], [], []>} : vector<2x256xf32>, vector<256x256xf32>, vector<2x256xf32> -> vector<2x256xf32>
    %c0_37 = arith.constant 0 : index
    %c0_38 = arith.constant 0 : index
    %72 = vector.load %arg4[%c0_37, %c0_38] : memref<1x256xf32, #tpu.memory_space<vmem>>, vector<1x256xf32>
    %73 = vector.broadcast %72 : vector<1x256xf32> to vector<2x256xf32>
    %74 = arith.addf %71, %73 : vector<2x256xf32>
    %75 = math.tanh %74 : vector<2x256xf32>
    %76 = arith.addf %69, %75 : vector<2x256xf32>
    %c0_39 = arith.constant 0 : index
    %c0_40 = arith.constant 0 : index
    %77 = vector.load %arg3[%c0_39, %c0_40] : memref<256x256xf32, #tpu.memory_space<vmem>>, vector<256x256xf32>
    %cst_41 = arith.constant dense<0.000000e+00> : vector<2x256xf32>
    %78 = tpu.matmul %75, %77, %cst_41 {dimension_numbers = #tpu.dot_dimension_numbers<[1], [0], [0], [1], [0, 0, 1, 1], [], []>} : vector<2x256xf32>, vector<256x256xf32>, vector<2x256xf32> -> vector<2x256xf32>
    %c0_42 = arith.constant 0 : index
    %c0_43 = arith.constant 0 : index
    %79 = vector.load %arg4[%c0_42, %c0_43] : memref<1x256xf32, #tpu.memory_space<vmem>>, vector<1x256xf32>
    %80 = vector.broadcast %79 : vector<1x256xf32> to vector<2x256xf32>
    %81 = arith.addf %78, %80 : vector<2x256xf32>
    %82 = math.tanh %81 : vector<2x256xf32>
    %83 = arith.addf %76, %82 : vector<2x256xf32>
    %c0_44 = arith.constant 0 : index
    %c0_45 = arith.constant 0 : index
    %84 = vector.load %arg3[%c0_44, %c0_45] : memref<256x256xf32, #tpu.memory_space<vmem>>, vector<256x256xf32>
    %cst_46 = arith.constant dense<0.000000e+00> : vector<2x256xf32>
    %85 = tpu.matmul %82, %84, %cst_46 {dimension_numbers = #tpu.dot_dimension_numbers<[1], [0], [0], [1], [0, 0, 1, 1], [], []>} : vector<2x256xf32>, vector<256x256xf32>, vector<2x256xf32> -> vector<2x256xf32>
    %c0_47 = arith.constant 0 : index
    %c0_48 = arith.constant 0 : index
    %86 = vector.load %arg4[%c0_47, %c0_48] : memref<1x256xf32, #tpu.memory_space<vmem>>, vector<1x256xf32>
    %87 = vector.broadcast %86 : vector<1x256xf32> to vector<2x256xf32>
    %88 = arith.addf %85, %87 : vector<2x256xf32>
    %89 = math.tanh %88 : vector<2x256xf32>
    %90 = arith.addf %83, %89 : vector<2x256xf32>
    %c0_49 = arith.constant 0 : index
    %c0_50 = arith.constant 0 : index
    %91 = vector.load %arg7[%c0_49, %c0_50] : memref<2x256xf32, #tpu.memory_space<vmem>>, vector<2x256xf32>
    tpu.vector_store %arg7[%c0_49, %c0_50], %90 {strides = array<i32>} : memref<2x256xf32, #tpu.memory_space<vmem>>, vector<2x256xf32>,
    %c0_51 = arith.constant 0 : index
    %c0_52 = arith.constant 0 : index
    %92 = vector.load %arg5[%c0_51, %c0_52] : memref<256x128xf32, #tpu.memory_space<vmem>>, vector<256x128xf32>
    %cst_53 = arith.constant dense<0.000000e+00> : vector<2x128xf32>
    %93 = tpu.matmul %90, %92, %cst_53 {dimension_numbers = #tpu.dot_dimension_numbers<[1], [0], [0], [1], [0, 0, 1, 1], [], []>} : vector<2x256xf32>, vector<256x128xf32>, vector<2x128xf32> -> vector<2x128xf32>
    %c0_54 = arith.constant 0 : index
    %c0_55 = arith.constant 0 : index
    %94 = vector.load %arg6[%c0_54, %c0_55] : memref<1x128xf32, #tpu.memory_space<vmem>>, vector<1x128xf32>
    %95 = vector.broadcast %94 : vector<1x128xf32> to vector<2x128xf32>
    %96 = arith.addf %93, %95 : vector<2x128xf32>
    %c0_56 = arith.constant 0 : index
    %c0_57 = arith.constant 0 : index
    %97 = vector.load %arg8[%c0_56, %c0_57] : memref<2x128xf32, #tpu.memory_space<vmem>>, vector<2x128xf32>
    tpu.vector_store %arg8[%c0_56, %c0_57], %96 {strides = array<i32>} : memref<2x128xf32, #tpu.memory_space<vmem>>, vector<2x128xf32>,
    return
  }
}

</mosaic_0001>

<llo_original>
// kernel: tpu_custom_call.1
$region0: #{tpu_custom_call.1}
  #allocation0 [shape = 'u32[]', space=smem, size = 0x4, offset = 0x4, fixed_abs, tag = 'smem constant byte address 0x4 - core index']
  #allocation1 [shape = 'u32[144,128]{1,0:T(1,128)}', space=vmem, size = 0x12000, scoped, tag = 'internal scratch']
  %s0 = inlined_call_operand.vmem [shape: s32[16,1], index: 0, kind: input, shape index: {}]
  %s1 = inlined_call_operand.vmem [shape: f32[16,64], index: 1, kind: input, shape index: {}]
  %s2 = inlined_call_operand.hbm [shape: f32[64,256], index: 2, kind: input, shape index: {}]
  %s3 = inlined_call_operand.hbm [shape: f32[256,256], index: 3, kind: input, shape index: {}]
  %s4 = inlined_call_operand.vmem [shape: f32[1,256], index: 4, kind: input, shape index: {}]
  %s5 = inlined_call_operand.hbm [shape: f32[256,128], index: 5, kind: input, shape index: {}]
  %s6 = inlined_call_operand.vmem [shape: f32[1,128], index: 6, kind: input, shape index: {}]
  %s7 = inlined_call_operand.hbm [shape: f32[2,256], index: 7, kind: output, shape index: {0}]
  %s8 = inlined_call_operand.hbm [shape: f32[2,128], index: 8, kind: output, shape index: {1}]
  %9 = xla_tuple %s7, %s8
  %s10 = sld [smem:[#allocation0]]
  $region58: #{tpu_custom_call.1} parent=0
    _
  %s12 = ssub.s32 1, %s10
  %s13 = scalar_select 0, %s12, %s10
  $region1: #{tpu_custom_call.1} parent=0
    #allocation2 [shape = 'u8[65536]{0}', space=vmem, size = 0x10000, scoped, tag = 'input window, operand 2, single buffered']
    #allocation3 [shape = 's32[1]{0}', space=sflag, size = 0x4, scoped, tag = 'scoped memory for tpu_custom_call.1']
    #allocation4 [shape = 's32[1]{0}', space=sflag, size = 0x4, scoped, tag = 'scoped memory for tpu_custom_call.1']
    #allocation5 [shape = 'u8[262144]{0}', space=vmem, size = 0x40000, scoped, tag = 'input window, operand 3, single buffered']
    #allocation6 [shape = 's32[1]{0}', space=sflag, size = 0x4, scoped, tag = 'scoped memory for tpu_custom_call.1']
    #allocation7 [shape = 'u8[131072]{0}', space=vmem, size = 0x20000, scoped, tag = 'input window, operand 5, single buffered']
    #allocation8 [shape = 'u8[2048]{0}', space=vmem, size = 0x800, scoped, tag = 'output window, operand 0, single buffered']
    #allocation9 [shape = 'u8[1024]{0}', space=vmem, size = 0x400, scoped, tag = 'output window, operand 1, single buffered']
    #allocation10 [shape = 's32[1]{0}', space=sflag, size = 0x4, scoped, tag = 'scoped memory for tpu_custom_call.1']
    %14 = vsyncpa [#allocation3], 0
    %15 = vsyncpa [#allocation6], 0
    %16 = vsyncpa [#allocation4], 0
    %17 = vsyncpa [#allocation10], 0
    // Predicated region
    $region2: #{tpu_custom_call.1} parent=1 // pred_check
      _
    $region3: #{tpu_custom_call.1} parent=1 // pred_check_branch
      %19 = sbr.rel (0) target = $region5
    $region4: #{tpu_custom_call.1} parent=1 // pred_region
      _
    $region5: #{tpu_custom_call.1} parent=1 // pred_fallthru
      _
    // Predicated region
    $region6: #{tpu_custom_call.1} parent=1 // pred_check
      _
    $region7: #{tpu_custom_call.1} parent=1 // pred_check_branch
      %21 = sbr.rel (0) target = $region9
    $region8: #{tpu_custom_call.1} parent=1 // pred_region
      _
    $region9: #{tpu_custom_call.1} parent=1 // pred_fallthru
      _
    // Predicated region
    $region10: #{tpu_custom_call.1} parent=1 // pred_check
      _
    $region11: #{tpu_custom_call.1} parent=1 // pred_check_branch
      %23 = sbr.rel (0) target = $region13
    $region12: #{tpu_custom_call.1} parent=1 // pred_region
      %s25 = ssub.s32 2048, 2048
      %26 = vsyncadd [#allocation3], %s25
      %s27 = sshll.u32 [#allocation2], 4
      %s28 = int_to_ptr.vmem [resolvable:$true] %s27
      %33 = dma.hbm_to_vmem [thread:$0]  %s2, 2048, %s28, [#allocation3], 256, 256, 16
    $region13: #{tpu_custom_call.1} parent=1 // pred_fallthru
      _
    // Predicated region
    $region14: #{tpu_custom_call.1} parent=1 // pred_check
      _
    $region15: #{tpu_custom_call.1} parent=1 // pred_check_branch
      %35 = sbr.rel (0) target = $region17
    $region16: #{tpu_custom_call.1} parent=1 // pred_region
      %s37 = ssub.s32 8192, 8192
      %38 = vsyncadd [#allocation6], %s37
      %s39 = sshll.u32 [#allocation5], 4
      %s40 = int_to_ptr.vmem [resolvable:$true] %s39
      %45 = dma.hbm_to_vmem [thread:$0]  %s3, 8192, %s40, [#allocation6], 256, 256, 16
    $region17: #{tpu_custom_call.1} parent=1 // pred_fallthru
      _
    // Predicated region
    $region18: #{tpu_custom_call.1} parent=1 // pred_check
      _
    $region19: #{tpu_custom_call.1} parent=1 // pred_check_branch
      %47 = sbr.rel (0) target = $region21
    $region20: #{tpu_custom_call.1} parent=1 // pred_region
      _
    $region21: #{tpu_custom_call.1} parent=1 // pred_fallthru
      _
    // Predicated region
    $region22: #{tpu_custom_call.1} parent=1 // pred_check
      _
    $region23: #{tpu_custom_call.1} parent=1 // pred_check_branch
      %49 = sbr.rel (0) target = $region25
    $region24: #{tpu_custom_call.1} parent=1 // pred_region
      %s51 = ssub.s32 4096, 4096
      %52 = vsyncadd [#allocation6], %s51
      %s53 = sshll.u32 [#allocation7], 4
      %s54 = int_to_ptr.vmem [resolvable:$true] %s53
      %59 = dma.hbm_to_vmem [thread:$0]  %s5, 4096, %s54, [#allocation6], 128, 128, 8
    $region25: #{tpu_custom_call.1} parent=1 // pred_fallthru
      _
    // Predicated region
    $region26: #{tpu_custom_call.1} parent=1 // pred_check
      _
    $region27: #{tpu_custom_call.1} parent=1 // pred_check_branch
      %61 = sbr.rel (0) target = $region29
    $region28: #{tpu_custom_call.1} parent=1 // pred_region
      _
    $region29: #{tpu_custom_call.1} parent=1 // pred_fallthru
      _
    // Predicated region
    $region30: #{tpu_custom_call.1} parent=1 // pred_check
      _
    $region31: #{tpu_custom_call.1} parent=1 // pred_check_branch
      %63 = sbr.rel (0) target = $region33
    $region32: #{tpu_custom_call.1} parent=1 // pred_region
      %64 = dma.done [#allocation3], 2048
    $region33: #{tpu_custom_call.1} parent=1 // pred_fallthru
      _
    // Predicated region
    $region34: #{tpu_custom_call.1} parent=1 // pred_check
      _
    $region35: #{tpu_custom_call.1} parent=1 // pred_check_branch
      %66 = sbr.rel (0) target = $region37
    $region36: #{tpu_custom_call.1} parent=1 // pred_region
      %67 = dma.done [#allocation6], 8192
    $region37: #{tpu_custom_call.1} parent=1 // pred_fallthru
      _
    // Predicated region
    $region38: #{tpu_custom_call.1} parent=1 // pred_check
      _
    $region39: #{tpu_custom_call.1} parent=1 // pred_check_branch
      %69 = sbr.rel (0) target = $region41
    $region40: #{tpu_custom_call.1} parent=1 // pred_region
      %70 = dma.done [#allocation6], 4096
    $region41: #{tpu_custom_call.1} parent=1 // pred_fallthru
      _
    %v71 = vld [vmem:[%s0] sm:$0xff]
    %v72 = vld [vmem:[%s0 + $0x8] sm:$0xff]
    %v73 = vlaneseq
    %v74 = vand.u32 %v73, 127
    %75 = vset.pattern.permute.xlu0 0
    %76 = vperm.xlu0 %75, %v71
    %v77 = vpop.permute.xlu0 %76
    %78 = vset.pattern.permute.xlu0 0
    %79 = vperm.xlu0 %78, %v72
    %v80 = vpop.permute.xlu0 %79
    %vm81 = vcmp.eq.s32.totalorder %v77, %v74
    %vm82 = vcmp.eq.s32.totalorder %v80, %v74
    %v83 = vsel %vm81, 1, 0
    %v84 = vsel %vm82, 1, 0
    %v85 = vcvt.s32.f32 %v83
    %v86 = vcvt.s32.f32 %v84
    %v87 = vld [vmem:[%s1] sm:$0xff]
    %v88 = vld [vmem:[%s1 + $0x8] sm:$0xff]
    %vm89 = vcmask 130048
    %v91 = vsel %vm89, %v85, 0
    %v94 = vsel %vm89, %v86, 0
    %96 = vmatprep.subr.mxu0 0.0
    %97 = vmatpush1.msra.mxu0 %v87
    %98 = vmatprep.subr.mxu0 0.0
    %99 = vmatpush1.msra.mxu0 %v88
    %100 = vmatprep.subr.mxu0 0.0
    %101 = vmatpush1.msra.mxu0 0.0
    %102 = vmatprep.subr.mxu0 0.0
    %103 = vmatpush1.msra.mxu0 0.0
    %104 = vmatprep.subr.mxu0 0.0
    %105 = vmatpush1.msra.mxu0 0.0
    %106 = vmatprep.subr.mxu0 0.0
    %107 = vmatpush1.msra.mxu0 0.0
    %108 = vmatprep.subr.mxu0 0.0
    %109 = vmatpush1.msra.mxu0 0.0
    %110 = vmatprep.subr.mxu0 0.0
    %111 = vmatpush1.msra.mxu0 0.0
    %112 = vmatprep.subr.mxu0 0.0
    %113 = vmatpush1.msra.mxu0 0.0
    %114 = vmatprep.subr.mxu0 0.0
    %115 = vmatpush1.msra.mxu0 0.0
    %116 = vmatprep.subr.mxu0 0.0
    %117 = vmatpush1.msra.mxu0 0.0
    %118 = vmatprep.subr.mxu0 0.0
    %119 = vmatpush1.msra.mxu0 0.0
    %120 = vmatprep.subr.mxu0 0.0
    %121 = vmatpush1.msra.mxu0 0.0
    %122 = vmatprep.subr.mxu0 0.0
    %123 = vmatpush1.msra.mxu0 0.0
    %124 = vmatprep.subr.mxu0 0.0
    %125 = vmatpush1.msra.mxu0 0.0
    %126 = vmatprep.subr.mxu0 0.0
    %127 = vmatpush1.msra.mxu0 0.0
    %128 = vmatprep.subr.mxu0 0.0
    %129 = vmatpush1.msra.mxu0 0.0
    %130 = vmatprep.subr.mxu0 0.0
    %131 = vmatpush1.msra.mxu0 0.0
    %132 = vmatprep.subr.mxu0 0.0
    %133 = vmatpush1.msra.mxu0 0.0
    %134 = vmatprep.subr.mxu0 0.0
    %135 = vmatpush1.msra.mxu0 0.0
    %136 = vmatprep.subr.mxu0 0.0
    %137 = vmatpush1.msra.mxu0 0.0
    %138 = vmatprep.subr.mxu0 0.0
    %139 = vmatpush1.msra.mxu0 0.0
    %140 = vmatprep.subr.mxu0 0.0
    %141 = vmatpush1.msra.mxu0 0.0
    %142 = vmatprep.subr.mxu0 0.0
    %143 = vmatpush1.msra.mxu0 0.0
    %144 = vmatprep.subr.mxu0 0.0
    %145 = vmatpush1.msra.mxu0 0.0
    %146 = vmatprep.subr.mxu0 0.0
    %147 = vmatpush1.msra.mxu0 0.0
    %148 = vmatprep.subr.mxu0 0.0
    %149 = vmatpush1.msra.mxu0 0.0
    %150 = vmatprep.subr.mxu0 0.0
    %151 = vmatpush1.msra.mxu0 0.0
    %152 = vmatprep.subr.mxu0 0.0
    %153 = vmatpush1.msra.mxu0 0.0
    %154 = vmatprep.subr.mxu0 0.0
    %155 = vmatpush1.msra.mxu0 0.0
    %156 = vmatprep.subr.mxu0 0.0
    %157 = vmatpush1.msra.mxu0 0.0
    %158 = vmatprep.subr.mxu0 0.0
    %159 = vmatpush1.msra.mxu0 0.0
    %160 = vmatprep.mubr.f32.mxu0 0.0
    %161 = vmatmul.mubr.f32.gmra.mrb[0].mxu0 %v91
    %v162 = vpop.f32.mrb[0].mxu0
    %v163 = vadd.f32 0.0, %v162
    %v164 = vpop.f32.mrb[0].mxu0
    %165 = vmatprep.mubr.f32.mxu0 0.0
    %166 = vmatmul.mubr.f32.gmra.mrb[0].mxu0 %v94
    %v167 = vpop.f32.mrb[0].mxu0
    %v168 = vadd.f32 0.0, %v167
    %v169 = vpop.f32.mrb[0].mxu0
    %170 = vdwg.mxu0
    %v171 = vld [vmem:[#allocation2] sm:$0xff]
    %v172 = vld [vmem:[#allocation2 + $0x8] sm:$0xff]
    %v173 = vld [vmem:[#allocation2 + $0x10] sm:$0xff]
    %v174 = vld [vmem:[#allocation2 + $0x18] sm:$0xff]
    %v175 = vld [vmem:[#allocation2 + $0x20] sm:$0xff]
    %v176 = vld [vmem:[#allocation2 + $0x28] sm:$0xff]
    %v177 = vld [vmem:[#allocation2 + $0x30] sm:$0xff]
    %v178 = vld [vmem:[#allocation2 + $0x38] sm:$0xff]
    %v179 = vld [vmem:[#allocation2 + $0x40] sm:$0xff]
    %v180 = vld [vmem:[#allocation2 + $0x48] sm:$0xff]
    %v181 = vld [vmem:[#allocation2 + $0x50] sm:$0xff]
    %v182 = vld [vmem:[#allocation2 + $0x58] sm:$0xff]
    %v183 = vld [vmem:[#allocation2 + $0x60] sm:$0xff]
    %v184 = vld [vmem:[#allocation2 + $0x68] sm:$0xff]
    %v185 = vld [vmem:[#allocation2 + $0x70] sm:$0xff]
    %v186 = vld [vmem:[#allocation2 + $0x78] sm:$0xff]
    %v187 = vld [vmem:[%s4] sm:$0x3]
    %v189 = vlaneseq
    %v190 = vshrl.u32 %v189, 7
    %v191 = vsub.s32 0, %v190
    %v192 = vrot.slane %v187, %v191
    %v193 = vlaneseq
    %v194 = vshrl.u32 %v193, 7
    %v195 = vsub.s32 1, %v194
    %v196 = vrot.slane %v187, %v195
    %vm199 = vcmask 523264
    %v201 = vsel %vm199, %v163, 0
    %v204 = vsel %vm199, %v168, 0
    %206 = vmatprep.subr.mxu0 %v172
    %207 = vmatpush1.msra.mxu0 %v171
    %208 = vmatprep.subr.mxu0 %v174
    %209 = vmatpush1.msra.mxu0 %v173
    %210 = vmatprep.subr.mxu0 %v176
    %211 = vmatpush1.msra.mxu0 %v175
    %212 = vmatprep.subr.mxu0 %v178
    %213 = vmatpush1.msra.mxu0 %v177
    %214 = vmatprep.subr.mxu0 %v180
    %215 = vmatpush1.msra.mxu0 %v179
    %216 = vmatprep.subr.mxu0 %v182
    %217 = vmatpush1.msra.mxu0 %v181
    %218 = vmatprep.subr.mxu0 %v184
    %219 = vmatpush1.msra.mxu0 %v183
    %220 = vmatprep.subr.mxu0 %v186
    %221 = vmatpush1.msra.mxu0 %v185
    %222 = vmatprep.subr.mxu0 0.0
    %223 = vmatpush1.msra.mxu0 0.0
    %224 = vmatprep.subr.mxu0 0.0
    %225 = vmatpush1.msra.mxu0 0.0
    %226 = vmatprep.subr.mxu0 0.0
    %227 = vmatpush1.msra.mxu0 0.0
    %228 = vmatprep.subr.mxu0 0.0
    %229 = vmatpush1.msra.mxu0 0.0
    %230 = vmatprep.subr.mxu0 0.0
    %231 = vmatpush1.msra.mxu0 0.0
    %232 = vmatprep.subr.mxu0 0.0
    %233 = vmatpush1.msra.mxu0 0.0
    %234 = vmatprep.subr.mxu0 0.0
    %235 = vmatpush1.msra.mxu0 0.0
    %236 = vmatprep.subr.mxu0 0.0
    %237 = vmatpush1.msra.mxu0 0.0
    %238 = vmatprep.subr.mxu0 0.0
    %239 = vmatpush1.msra.mxu0 0.0
    %240 = vmatprep.subr.mxu0 0.0
    %241 = vmatpush1.msra.mxu0 0.0
    %242 = vmatprep.subr.mxu0 0.0
    %243 = vmatpush1.msra.mxu0 0.0
    %244 = vmatprep.subr.mxu0 0.0
    %245 = vmatpush1.msra.mxu0 0.0
    %246 = vmatprep.subr.mxu0 0.0
    %247 = vmatpush1.msra.mxu0 0.0
    %248 = vmatprep.subr.mxu0 0.0
    %249 = vmatpush1.msra.mxu0 0.0
    %250 = vmatprep.subr.mxu0 0.0
    %251 = vmatpush1.msra.mxu0 0.0
    %252 = vmatprep.subr.mxu0 0.0
    %253 = vmatpush1.msra.mxu0 0.0
    %254 = vmatprep.subr.mxu0 0.0
    %255 = vmatpush1.msra.mxu0 0.0
    %256 = vmatprep.subr.mxu0 0.0
    %257 = vmatpush1.msra.mxu0 0.0
    %258 = vmatprep.subr.mxu0 0.0
    %259 = vmatpush1.msra.mxu0 0.0
    %260 = vmatprep.subr.mxu0 0.0
    %261 = vmatpush1.msra.mxu0 0.0
    %262 = vmatprep.subr.mxu0 0.0
    %263 = vmatpush1.msra.mxu0 0.0
    %264 = vmatprep.subr.mxu0 0.0
    %265 = vmatpush1.msra.mxu0 0.0
    %266 = vmatprep.subr.mxu0 0.0
    %267 = vmatpush1.msra.mxu0 0.0
    %268 = vmatprep.subr.mxu0 0.0
    %269 = vmatpush1.msra.mxu0 0.0
    %270 = vmatprep.mubr.f32.mxu0 0.0
    %271 = vmatmul.mubr.f32.gmra.mrb[0].mxu0 %v201
    %v272 = vpop.f32.mrb[0].mxu0
    %v273 = vadd.f32 %v192, %v272
    %v274 = vpop.f32.mrb[0].mxu0
    %v275 = vadd.f32 %v196, %v274
    %276 = vmatprep.mubr.f32.mxu0 0.0
    %277 = vmatmul.mubr.f32.gmra.mrb[0].mxu0 %v204
    %v278 = vpop.f32.mrb[0].mxu0
    %v279 = vadd.f32 %v192, %v278
    %v280 = vpop.f32.mrb[0].mxu0
    %v281 = vadd.f32 %v196, %v280
    %282 = vdwg.mxu0
    %v283 = vadd.s32 %v74, 128
    %v284 = vld [vmem:[#allocation5] sm:$0xff]
    %v285 = vld [vmem:[#allocation5 + $0x8] sm:$0xff]
    %v286 = vld [vmem:[#allocation5 + $0x10] sm:$0xff]
    %v287 = vld [vmem:[#allocation5 + $0x18] sm:$0xff]
    %v288 = vld [vmem:[#allocation5 + $0x20] sm:$0xff]
    %v289 = vld [vmem:[#allocation5 + $0x28] sm:$0xff]
    %v290 = vld [vmem:[#allocation5 + $0x30] sm:$0xff]
    %v291 = vld [vmem:[#allocation5 + $0x38] sm:$0xff]
    %v292 = vld [vmem:[#allocation5 + $0x40] sm:$0xff]
    %v293 = vld [vmem:[#allocation5 + $0x48] sm:$0xff]
    %v294 = vld [vmem:[#allocation5 + $0x50] sm:$0xff]
    %v295 = vld [vmem:[#allocation5 + $0x58] sm:$0xff]
    %v296 = vld [vmem:[#allocation5 + $0x60] sm:$0xff]
    %v297 = vld [vmem:[#allocation5 + $0x68] sm:$0xff]
    %v298 = vld [vmem:[#allocation5 + $0x70] sm:$0xff]
    %v299 = vld [vmem:[#allocation5 + $0x78] sm:$0xff]
    %v300 = vld [vmem:[#allocation5 + $0x80] sm:$0xff]
    %v301 = vld [vmem:[#allocation5 + $0x88] sm:$0xff]
    %v302 = vld [vmem:[#allocation5 + $0x90] sm:$0xff]
    %v303 = vld [vmem:[#allocation5 + $0x98] sm:$0xff]
    %v304 = vld [vmem:[#allocation5 + $0xa0] sm:$0xff]
    %v305 = vld [vmem:[#allocation5 + $0xa8] sm:$0xff]
    %v306 = vld [vmem:[#allocation5 + $0xb0] sm:$0xff]
    %v307 = vld [vmem:[#allocation5 + $0xb8] sm:$0xff]
    %v308 = vld [vmem:[#allocation5 + $0xc0] sm:$0xff]
    %v309 = vld [vmem:[#allocation5 + $0xc8] sm:$0xff]
    %v310 = vld [vmem:[#allocation5 + $0xd0] sm:$0xff]
    %v311 = vld [vmem:[#allocation5 + $0xd8] sm:$0xff]
    %v312 = vld [vmem:[#allocation5 + $0xe0] sm:$0xff]
    %v313 = vld [vmem:[#allocation5 + $0xe8] sm:$0xff]
    %v314 = vld [vmem:[#allocation5 + $0xf0] sm:$0xff]
    %v315 = vld [vmem:[#allocation5 + $0xf8] sm:$0xff]
    %v316 = vld [vmem:[#allocation5 + $0x100] sm:$0xff]
    %v317 = vld [vmem:[#allocation5 + $0x108] sm:$0xff]
    %v318 = vld [vmem:[#allocation5 + $0x110] sm:$0xff]
    %v319 = vld [vmem:[#allocation5 + $0x118] sm:$0xff]
    %v320 = vld [vmem:[#allocation5 + $0x120] sm:$0xff]
    %v321 = vld [vmem:[#allocation5 + $0x128] sm:$0xff]
    %v322 = vld [vmem:[#allocation5 + $0x130] sm:$0xff]
    %v323 = vld [vmem:[#allocation5 + $0x138] sm:$0xff]
    %v324 = vld [vmem:[#allocation5 + $0x140] sm:$0xff]
    %v325 = vld [vmem:[#allocation5 + $0x148] sm:$0xff]
    %v326 = vld [vmem:[#allocation5 + $0x150] sm:$0xff]
    %v327 = vld [vmem:[#allocation5 + $0x158] sm:$0xff]
    %v328 = vld [vmem:[#allocation5 + $0x160] sm:$0xff]
    %v329 = vld [vmem:[#allocation5 + $0x168] sm:$0xff]
    %v330 = vld [vmem:[#allocation5 + $0x170] sm:$0xff]
    %v331 = vld [vmem:[#allocation5 + $0x178] sm:$0xff]
    %v332 = vld [vmem:[#allocation5 + $0x180] sm:$0xff]
    %v333 = vld [vmem:[#allocation5 + $0x188] sm:$0xff]
    %v334 = vld [vmem:[#allocation5 + $0x190] sm:$0xff]
    %v335 = vld [vmem:[#allocation5 + $0x198] sm:$0xff]
    %v336 = vld [vmem:[#allocation5 + $0x1a0] sm:$0xff]
    %v337 = vld [vmem:[#allocation5 + $0x1a8] sm:$0xff]
    %v338 = vld [vmem:[#allocation5 + $0x1b0] sm:$0xff]
    %v339 = vld [vmem:[#allocation5 + $0x1b8] sm:$0xff]
    %v340 = vld [vmem:[#allocation5 + $0x1c0] sm:$0xff]
    %v341 = vld [vmem:[#allocation5 + $0x1c8] sm:$0xff]
    %v342 = vld [vmem:[#allocation5 + $0x1d0] sm:$0xff]
    %v343 = vld [vmem:[#allocation5 + $0x1d8] sm:$0xff]
    %v344 = vld [vmem:[#allocation5 + $0x1e0] sm:$0xff]
    %v345 = vld [vmem:[#allocation5 + $0x1e8] sm:$0xff]
    %v346 = vld [vmem:[#allocation5 + $0x1f0] sm:$0xff]
    %v347 = vld [vmem:[#allocation5 + $0x1f8] sm:$0xff]
    %348 = vmatprep.subr.mxu0 %v285
    %349 = vmatpush1.msra.mxu0 %v284
    %350 = vmatprep.subr.mxu0 %v287
    %351 = vmatpush1.msra.mxu0 %v286
    %352 = vmatprep.subr.mxu0 %v289
    %353 = vmatpush1.msra.mxu0 %v288
    %354 = vmatprep.subr.mxu0 %v291
    %355 = vmatpush1.msra.mxu0 %v290
    %356 = vmatprep.subr.mxu0 %v293
    %357 = vmatpush1.msra.mxu0 %v292
    %358 = vmatprep.subr.mxu0 %v295
    %359 = vmatpush1.msra.mxu0 %v294
    %360 = vmatprep.subr.mxu0 %v297
    %361 = vmatpush1.msra.mxu0 %v296
    %362 = vmatprep.subr.mxu0 %v299
    %363 = vmatpush1.msra.mxu0 %v298
    %364 = vmatprep.subr.mxu0 %v301
    %365 = vmatpush1.msra.mxu0 %v300
    %366 = vmatprep.subr.mxu0 %v303
    %367 = vmatpush1.msra.mxu0 %v302
    %368 = vmatprep.subr.mxu0 %v305
    %369 = vmatpush1.msra.mxu0 %v304
    %370 = vmatprep.subr.mxu0 %v307
    %371 = vmatpush1.msra.mxu0 %v306
    %372 = vmatprep.subr.mxu0 %v309
    %373 = vmatpush1.msra.mxu0 %v308
    %374 = vmatprep.subr.mxu0 %v311
    %375 = vmatpush1.msra.mxu0 %v310
    %376 = vmatprep.subr.mxu0 %v313
    %377 = vmatpush1.msra.mxu0 %v312
    %378 = vmatprep.subr.mxu0 %v315
    %379 = vmatpush1.msra.mxu0 %v314
    %380 = vmatprep.subr.mxu0 %v317
    %381 = vmatpush1.msra.mxu0 %v316
    %382 = vmatprep.subr.mxu0 %v319
    %383 = vmatpush1.msra.mxu0 %v318
    %384 = vmatprep.subr.mxu0 %v321
    %385 = vmatpush1.msra.mxu0 %v320
    %386 = vmatprep.subr.mxu0 %v323
    %387 = vmatpush1.msra.mxu0 %v322
    %388 = vmatprep.subr.mxu0 %v325
    %389 = vmatpush1.msra.mxu0 %v324
    %390 = vmatprep.subr.mxu0 %v327
    %391 = vmatpush1.msra.mxu0 %v326
    %392 = vmatprep.subr.mxu0 %v329
    %393 = vmatpush1.msra.mxu0 %v328
    %394 = vmatprep.subr.mxu0 %v331
    %395 = vmatpush1.msra.mxu0 %v330
    %396 = vmatprep.subr.mxu0 %v333
    %397 = vmatpush1.msra.mxu0 %v332
    %398 = vmatprep.subr.mxu0 %v335
    %399 = vmatpush1.msra.mxu0 %v334
    %400 = vmatprep.subr.mxu0 %v337
    %401 = vmatpush1.msra.mxu0 %v336
    %402 = vmatprep.subr.mxu0 %v339
    %403 = vmatpush1.msra.mxu0 %v338
    %404 = vmatprep.subr.mxu0 %v341
    %405 = vmatpush1.msra.mxu0 %v340
    %406 = vmatprep.subr.mxu0 %v343
    %407 = vmatpush1.msra.mxu0 %v342
    %408 = vmatprep.subr.mxu0 %v345
    %409 = vmatpush1.msra.mxu0 %v344
    %410 = vmatprep.subr.mxu0 %v347
    %411 = vmatpush1.msra.mxu0 %v346
    %412 = vmatprep.mubr.f32.mxu0 0.0
    %413 = vmatmul.mubr.f32.gmra.mrb[0].mxu0 0.0
    %v414 = vpop.f32.mrb[0].mxu0
    %v415 = vadd.f32 %v273, %v414
    %v416 = vpop.f32.mrb[0].mxu0
    %v417 = vadd.f32 %v275, %v416
    %418 = vdwg.mxu0
    %v419 = vtanh.pop %v415
    %v420 = vtanh.pop %v417
    %vm421 = vcmp.lt.s32.totalorder %v74, 64
    %vm422 = vcmp.lt.s32.totalorder %v283, 64
    %v423 = vsel %vm421, %v419, 0.0
    %v424 = vsel %vm422, %v420, 0.0
    %v427 = vrot.slane %v273, 2
    %v428 = vrot.slane %v275, 2
    %431 = vmatprep.subr.mxu0 %v285
    %432 = vmatpush1.msra.mxu0 %v284
    %433 = vmatprep.subr.mxu0 %v287
    %434 = vmatpush1.msra.mxu0 %v286
    %435 = vmatprep.subr.mxu0 %v289
    %436 = vmatpush1.msra.mxu0 %v288
    %437 = vmatprep.subr.mxu0 %v291
    %438 = vmatpush1.msra.mxu0 %v290
    %439 = vmatprep.subr.mxu0 %v293
    %440 = vmatpush1.msra.mxu0 %v292
    %441 = vmatprep.subr.mxu0 %v295
    %442 = vmatpush1.msra.mxu0 %v294
    %443 = vmatprep.subr.mxu0 %v297
    %444 = vmatpush1.msra.mxu0 %v296
    %445 = vmatprep.subr.mxu0 %v299
    %446 = vmatpush1.msra.mxu0 %v298
    %447 = vmatprep.subr.mxu0 %v301
    %448 = vmatpush1.msra.mxu0 %v300
    %449 = vmatprep.subr.mxu0 %v303
    %450 = vmatpush1.msra.mxu0 %v302
    %451 = vmatprep.subr.mxu0 %v305
    %452 = vmatpush1.msra.mxu0 %v304
    %453 = vmatprep.subr.mxu0 %v307
    %454 = vmatpush1.msra.mxu0 %v306
    %455 = vmatprep.subr.mxu0 %v309
    %456 = vmatpush1.msra.mxu0 %v308
    %457 = vmatprep.subr.mxu0 %v311
    %458 = vmatpush1.msra.mxu0 %v310
    %459 = vmatprep.subr.mxu0 %v313
    %460 = vmatpush1.msra.mxu0 %v312
    %461 = vmatprep.subr.mxu0 %v315
    %462 = vmatpush1.msra.mxu0 %v314
    %463 = vmatprep.subr.mxu0 %v317
    %464 = vmatpush1.msra.mxu0 %v316
    %465 = vmatprep.subr.mxu0 %v319
    %466 = vmatpush1.msra.mxu0 %v318
    %467 = vmatprep.subr.mxu0 %v321
    %468 = vmatpush1.msra.mxu0 %v320
    %469 = vmatprep.subr.mxu0 %v323
    %470 = vmatpush1.msra.mxu0 %v322
    %471 = vmatprep.subr.mxu0 %v325
    %472 = vmatpush1.msra.mxu0 %v324
    %473 = vmatprep.subr.mxu0 %v327
    %474 = vmatpush1.msra.mxu0 %v326
    %475 = vmatprep.subr.mxu0 %v329
    %476 = vmatpush1.msra.mxu0 %v328
    %477 = vmatprep.subr.mxu0 %v331
    %478 = vmatpush1.msra.mxu0 %v330
    %479 = vmatprep.subr.mxu0 %v333
    %480 = vmatpush1.msra.mxu0 %v332
    %481 = vmatprep.subr.mxu0 %v335
    %482 = vmatpush1.msra.mxu0 %v334
    %483 = vmatprep.subr.mxu0 %v337
    %484 = vmatpush1.msra.mxu0 %v336
    %485 = vmatprep.subr.mxu0 %v339
    %486 = vmatpush1.msra.mxu0 %v338
    %487 = vmatprep.subr.mxu0 %v341
    %488 = vmatpush1.msra.mxu0 %v340
    %489 = vmatprep.subr.mxu0 %v343
    %490 = vmatpush1.msra.mxu0 %v342
    %491 = vmatprep.subr.mxu0 %v345
    %492 = vmatpush1.msra.mxu0 %v344
    %493 = vmatprep.subr.mxu0 %v347
    %494 = vmatpush1.msra.mxu0 %v346
    %495 = vmatprep.mubr.f32.mxu0 %v424
    %496 = vmatmul.mubr.f32.gmra.mrb[0].mxu0 %v423
    %v497 = vpop.f32.mrb[0].mxu0
    %v498 = vadd.f32 %v427, %v497
    %v499 = vpop.f32.mrb[0].mxu0
    %v500 = vadd.f32 %v428, %v499
    %501 = vdwg.mxu0
    %v502 = vtanh.pop %v498
    %v503 = vtanh.pop %v500
    %vm504 = vcmp.lt.s32.totalorder %v74, 128
    %vm505 = vcmp.lt.s32.totalorder %v283, 128
    %v506 = vsel %vm504, %v502, %v423
    %v507 = vsel %vm505, %v503, %v424
    %v508 = vrot.slane %v273, 4
    %v509 = vrot.slane %v275, 4
    %512 = vmatprep.subr.mxu0 %v285
    %513 = vmatpush1.msra.mxu0 %v284
    %514 = vmatprep.subr.mxu0 %v287
    %515 = vmatpush1.msra.mxu0 %v286
    %516 = vmatprep.subr.mxu0 %v289
    %517 = vmatpush1.msra.mxu0 %v288
    %518 = vmatprep.subr.mxu0 %v291
    %519 = vmatpush1.msra.mxu0 %v290
    %520 = vmatprep.subr.mxu0 %v293
    %521 = vmatpush1.msra.mxu0 %v292
    %522 = vmatprep.subr.mxu0 %v295
    %523 = vmatpush1.msra.mxu0 %v294
    %524 = vmatprep.subr.mxu0 %v297
    %525 = vmatpush1.msra.mxu0 %v296
    %526 = vmatprep.subr.mxu0 %v299
    %527 = vmatpush1.msra.mxu0 %v298
    %528 = vmatprep.subr.mxu0 %v301
    %529 = vmatpush1.msra.mxu0 %v300
    %530 = vmatprep.subr.mxu0 %v303
    %531 = vmatpush1.msra.mxu0 %v302
    %532 = vmatprep.subr.mxu0 %v305
    %533 = vmatpush1.msra.mxu0 %v304
    %534 = vmatprep.subr.mxu0 %v307
    %535 = vmatpush1.msra.mxu0 %v306
    %536 = vmatprep.subr.mxu0 %v309
    %537 = vmatpush1.msra.mxu0 %v308
    %538 = vmatprep.subr.mxu0 %v311
    %539 = vmatpush1.msra.mxu0 %v310
    %540 = vmatprep.subr.mxu0 %v313
    %541 = vmatpush1.msra.mxu0 %v312
    %542 = vmatprep.subr.mxu0 %v315
    %543 = vmatpush1.msra.mxu0 %v314
    %544 = vmatprep.subr.mxu0 %v317
    %545 = vmatpush1.msra.mxu0 %v316
    %546 = vmatprep.subr.mxu0 %v319
    %547 = vmatpush1.msra.mxu0 %v318
    %548 = vmatprep.subr.mxu0 %v321
    %549 = vmatpush1.msra.mxu0 %v320
    %550 = vmatprep.subr.mxu0 %v323
    %551 = vmatpush1.msra.mxu0 %v322
    %552 = vmatprep.subr.mxu0 %v325
    %553 = vmatpush1.msra.mxu0 %v324
    %554 = vmatprep.subr.mxu0 %v327
    %555 = vmatpush1.msra.mxu0 %v326
    %556 = vmatprep.subr.mxu0 %v329
    %557 = vmatpush1.msra.mxu0 %v328
    %558 = vmatprep.subr.mxu0 %v331
    %559 = vmatpush1.msra.mxu0 %v330
    %560 = vmatprep.subr.mxu0 %v333
    %561 = vmatpush1.msra.mxu0 %v332
    %562 = vmatprep.subr.mxu0 %v335
    %563 = vmatpush1.msra.mxu0 %v334
    %564 = vmatprep.subr.mxu0 %v337
    %565 = vmatpush1.msra.mxu0 %v336
    %566 = vmatprep.subr.mxu0 %v339
    %567 = vmatpush1.msra.mxu0 %v338
    %568 = vmatprep.subr.mxu0 %v341
    %569 = vmatpush1.msra.mxu0 %v340
    %570 = vmatprep.subr.mxu0 %v343
    %571 = vmatpush1.msra.mxu0 %v342
    %572 = vmatprep.subr.mxu0 %v345
    %573 = vmatpush1.msra.mxu0 %v344
    %574 = vmatprep.subr.mxu0 %v347
    %575 = vmatpush1.msra.mxu0 %v346
    %576 = vmatprep.mubr.f32.mxu0 %v507
    %577 = vmatmul.mubr.f32.gmra.mrb[0].mxu0 %v506
    %v578 = vpop.f32.mrb[0].mxu0
    %v579 = vadd.f32 %v508, %v578
    %v580 = vpop.f32.mrb[0].mxu0
    %v581 = vadd.f32 %v509, %v580
    %582 = vdwg.mxu0
    %v583 = vtanh.pop %v579
    %v584 = vtanh.pop %v581
    %vm585 = vcmp.lt.s32.totalorder %v74, 192
    %vm586 = vcmp.lt.s32.totalorder %v283, 192
    %v587 = vsel %vm585, %v583, %v506
    %v588 = vsel %vm586, %v584, %v507
    %v589 = vrot.slane %v273, 6
    %v590 = vrot.slane %v275, 6
    %593 = vmatprep.subr.mxu0 %v285
    %594 = vmatpush1.msra.mxu0 %v284
    %595 = vmatprep.subr.mxu0 %v287
    %596 = vmatpush1.msra.mxu0 %v286
    %597 = vmatprep.subr.mxu0 %v289
    %598 = vmatpush1.msra.mxu0 %v288
    %599 = vmatprep.subr.mxu0 %v291
    %600 = vmatpush1.msra.mxu0 %v290
    %601 = vmatprep.subr.mxu0 %v293
    %602 = vmatpush1.msra.mxu0 %v292
    %603 = vmatprep.subr.mxu0 %v295
    %604 = vmatpush1.msra.mxu0 %v294
    %605 = vmatprep.subr.mxu0 %v297
    %606 = vmatpush1.msra.mxu0 %v296
    %607 = vmatprep.subr.mxu0 %v299
    %608 = vmatpush1.msra.mxu0 %v298
    %609 = vmatprep.subr.mxu0 %v301
    %610 = vmatpush1.msra.mxu0 %v300
    %611 = vmatprep.subr.mxu0 %v303
    %612 = vmatpush1.msra.mxu0 %v302
    %613 = vmatprep.subr.mxu0 %v305
    %614 = vmatpush1.msra.mxu0 %v304
    %615 = vmatprep.subr.mxu0 %v307
    %616 = vmatpush1.msra.mxu0 %v306
    %617 = vmatprep.subr.mxu0 %v309
    %618 = vmatpush1.msra.mxu0 %v308
    %619 = vmatprep.subr.mxu0 %v311
    %620 = vmatpush1.msra.mxu0 %v310
    %621 = vmatprep.subr.mxu0 %v313
    %622 = vmatpush1.msra.mxu0 %v312
    %623 = vmatprep.subr.mxu0 %v315
    %624 = vmatpush1.msra.mxu0 %v314
    %625 = vmatprep.subr.mxu0 %v317
    %626 = vmatpush1.msra.mxu0 %v316
    %627 = vmatprep.subr.mxu0 %v319
    %628 = vmatpush1.msra.mxu0 %v318
    %629 = vmatprep.subr.mxu0 %v321
    %630 = vmatpush1.msra.mxu0 %v320
    %631 = vmatprep.subr.mxu0 %v323
    %632 = vmatpush1.msra.mxu0 %v322
    %633 = vmatprep.subr.mxu0 %v325
    %634 = vmatpush1.msra.mxu0 %v324
    %635 = vmatprep.subr.mxu0 %v327
    %636 = vmatpush1.msra.mxu0 %v326
    %637 = vmatprep.subr.mxu0 %v329
    %638 = vmatpush1.msra.mxu0 %v328
    %639 = vmatprep.subr.mxu0 %v331
    %640 = vmatpush1.msra.mxu0 %v330
    %641 = vmatprep.subr.mxu0 %v333
    %642 = vmatpush1.msra.mxu0 %v332
    %643 = vmatprep.subr.mxu0 %v335
    %644 = vmatpush1.msra.mxu0 %v334
    %645 = vmatprep.subr.mxu0 %v337
    %646 = vmatpush1.msra.mxu0 %v336
    %647 = vmatprep.subr.mxu0 %v339
    %648 = vmatpush1.msra.mxu0 %v338
    %649 = vmatprep.subr.mxu0 %v341
    %650 = vmatpush1.msra.mxu0 %v340
    %651 = vmatprep.subr.mxu0 %v343
    %652 = vmatpush1.msra.mxu0 %v342
    %653 = vmatprep.subr.mxu0 %v345
    %654 = vmatpush1.msra.mxu0 %v344
    %655 = vmatprep.subr.mxu0 %v347
    %656 = vmatpush1.msra.mxu0 %v346
    %657 = vmatprep.mubr.f32.mxu0 %v588
    %658 = vmatmul.mubr.f32.gmra.mrb[0].mxu0 %v587
    %v659 = vpop.f32.mrb[0].mxu0
    %v660 = vadd.f32 %v589, %v659
    %v661 = vpop.f32.mrb[0].mxu0
    %v662 = vadd.f32 %v590, %v661
    %663 = vdwg.mxu0
    %v664 = vtanh.pop %v660
    %v665 = vtanh.pop %v662
    %v666 = vadd.f32 %v664, 0.0
    %v667 = vadd.f32 %v665, 0.0
    %668 = vmatprep.subr.mxu0 %v285
    %669 = vmatpush1.msra.mxu0 %v284
    %670 = vmatprep.subr.mxu0 %v287
    %671 = vmatpush1.msra.mxu0 %v286
    %672 = vmatprep.subr.mxu0 %v289
    %673 = vmatpush1.msra.mxu0 %v288
    %674 = vmatprep.subr.mxu0 %v291
    %675 = vmatpush1.msra.mxu0 %v290
    %676 = vmatprep.subr.mxu0 %v293
    %677 = vmatpush1.msra.mxu0 %v292
    %678 = vmatprep.subr.mxu0 %v295
    %679 = vmatpush1.msra.mxu0 %v294
    %680 = vmatprep.subr.mxu0 %v297
    %681 = vmatpush1.msra.mxu0 %v296
    %682 = vmatprep.subr.mxu0 %v299
    %683 = vmatpush1.msra.mxu0 %v298
    %684 = vmatprep.subr.mxu0 %v301
    %685 = vmatpush1.msra.mxu0 %v300
    %686 = vmatprep.subr.mxu0 %v303
    %687 = vmatpush1.msra.mxu0 %v302
    %688 = vmatprep.subr.mxu0 %v305
    %689 = vmatpush1.msra.mxu0 %v304
    %690 = vmatprep.subr.mxu0 %v307
    %691 = vmatpush1.msra.mxu0 %v306
    %692 = vmatprep.subr.mxu0 %v309
    %693 = vmatpush1.msra.mxu0 %v308
    %694 = vmatprep.subr.mxu0 %v311
    %695 = vmatpush1.msra.mxu0 %v310
    %696 = vmatprep.subr.mxu0 %v313
    %697 = vmatpush1.msra.mxu0 %v312
    %698 = vmatprep.subr.mxu0 %v315
    %699 = vmatpush1.msra.mxu0 %v314
    %700 = vmatprep.subr.mxu0 %v317
    %701 = vmatpush1.msra.mxu0 %v316
    %702 = vmatprep.subr.mxu0 %v319
    %703 = vmatpush1.msra.mxu0 %v318
    %704 = vmatprep.subr.mxu0 %v321
    %705 = vmatpush1.msra.mxu0 %v320
    %706 = vmatprep.subr.mxu0 %v323
    %707 = vmatpush1.msra.mxu0 %v322
    %708 = vmatprep.subr.mxu0 %v325
    %709 = vmatpush1.msra.mxu0 %v324
    %710 = vmatprep.subr.mxu0 %v327
    %711 = vmatpush1.msra.mxu0 %v326
    %712 = vmatprep.subr.mxu0 %v329
    %713 = vmatpush1.msra.mxu0 %v328
    %714 = vmatprep.subr.mxu0 %v331
    %715 = vmatpush1.msra.mxu0 %v330
    %716 = vmatprep.subr.mxu0 %v333
    %717 = vmatpush1.msra.mxu0 %v332
    %718 = vmatprep.subr.mxu0 %v335
    %719 = vmatpush1.msra.mxu0 %v334
    %720 = vmatprep.subr.mxu0 %v337
    %721 = vmatpush1.msra.mxu0 %v336
    %722 = vmatprep.subr.mxu0 %v339
    %723 = vmatpush1.msra.mxu0 %v338
    %724 = vmatprep.subr.mxu0 %v341
    %725 = vmatpush1.msra.mxu0 %v340
    %726 = vmatprep.subr.mxu0 %v343
    %727 = vmatpush1.msra.mxu0 %v342
    %728 = vmatprep.subr.mxu0 %v345
    %729 = vmatpush1.msra.mxu0 %v344
    %730 = vmatprep.subr.mxu0 %v347
    %731 = vmatpush1.msra.mxu0 %v346
    %732 = vmatprep.mubr.f32.mxu0 %v665
    %733 = vmatmul.mubr.f32.gmra.mrb[0].mxu0 %v664
    %v734 = vpop.f32.mrb[0].mxu0
    %v735 = vadd.f32 %v279, %v734
    %v736 = vpop.f32.mrb[0].mxu0
    %v737 = vadd.f32 %v281, %v736
    %738 = vdwg.mxu0
    %v739 = vtanh.pop %v735
    %v740 = vtanh.pop %v737
    %v741 = vadd.f32 %v666, %v739
    %v742 = vadd.f32 %v667, %v740
    %v745 = vrot.slane %v279, 2
    %v746 = vrot.slane %v281, 2
    %749 = vmatprep.subr.mxu0 %v285
    %750 = vmatpush1.msra.mxu0 %v284
    %751 = vmatprep.subr.mxu0 %v287
    %752 = vmatpush1.msra.mxu0 %v286
    %753 = vmatprep.subr.mxu0 %v289
    %754 = vmatpush1.msra.mxu0 %v288
    %755 = vmatprep.subr.mxu0 %v291
    %756 = vmatpush1.msra.mxu0 %v290
    %757 = vmatprep.subr.mxu0 %v293
    %758 = vmatpush1.msra.mxu0 %v292
    %759 = vmatprep.subr.mxu0 %v295
    %760 = vmatpush1.msra.mxu0 %v294
    %761 = vmatprep.subr.mxu0 %v297
    %762 = vmatpush1.msra.mxu0 %v296
    %763 = vmatprep.subr.mxu0 %v299
    %764 = vmatpush1.msra.mxu0 %v298
    %765 = vmatprep.subr.mxu0 %v301
    %766 = vmatpush1.msra.mxu0 %v300
    %767 = vmatprep.subr.mxu0 %v303
    %768 = vmatpush1.msra.mxu0 %v302
    %769 = vmatprep.subr.mxu0 %v305
    %770 = vmatpush1.msra.mxu0 %v304
    %771 = vmatprep.subr.mxu0 %v307
    %772 = vmatpush1.msra.mxu0 %v306
    %773 = vmatprep.subr.mxu0 %v309
    %774 = vmatpush1.msra.mxu0 %v308
    %775 = vmatprep.subr.mxu0 %v311
    %776 = vmatpush1.msra.mxu0 %v310
    %777 = vmatprep.subr.mxu0 %v313
    %778 = vmatpush1.msra.mxu0 %v312
    %779 = vmatprep.subr.mxu0 %v315
    %780 = vmatpush1.msra.mxu0 %v314
    %781 = vmatprep.subr.mxu0 %v317
    %782 = vmatpush1.msra.mxu0 %v316
    %783 = vmatprep.subr.mxu0 %v319
    %784 = vmatpush1.msra.mxu0 %v318
    %785 = vmatprep.subr.mxu0 %v321
    %786 = vmatpush1.msra.mxu0 %v320
    %787 = vmatprep.subr.mxu0 %v323
    %788 = vmatpush1.msra.mxu0 %v322
    %789 = vmatprep.subr.mxu0 %v325
    %790 = vmatpush1.msra.mxu0 %v324
    %791 = vmatprep.subr.mxu0 %v327
    %792 = vmatpush1.msra.mxu0 %v326
    %793 = vmatprep.subr.mxu0 %v329
    %794 = vmatpush1.msra.mxu0 %v328
    %795 = vmatprep.subr.mxu0 %v331
    %796 = vmatpush1.msra.mxu0 %v330
    %797 = vmatprep.subr.mxu0 %v333
    %798 = vmatpush1.msra.mxu0 %v332
    %799 = vmatprep.subr.mxu0 %v335
    %800 = vmatpush1.msra.mxu0 %v334
    %801 = vmatprep.subr.mxu0 %v337
    %802 = vmatpush1.msra.mxu0 %v336
    %803 = vmatprep.subr.mxu0 %v339
    %804 = vmatpush1.msra.mxu0 %v338
    %805 = vmatprep.subr.mxu0 %v341
    %806 = vmatpush1.msra.mxu0 %v340
    %807 = vmatprep.subr.mxu0 %v343
    %808 = vmatpush1.msra.mxu0 %v342
    %809 = vmatprep.subr.mxu0 %v345
    %810 = vmatpush1.msra.mxu0 %v344
    %811 = vmatprep.subr.mxu0 %v347
    %812 = vmatpush1.msra.mxu0 %v346
    %813 = vmatprep.mubr.f32.mxu0 %v740
    %814 = vmatmul.mubr.f32.gmra.mrb[0].mxu0 %v739
    %v815 = vpop.f32.mrb[0].mxu0
    %v816 = vadd.f32 %v745, %v815
    %v817 = vpop.f32.mrb[0].mxu0
    %v818 = vadd.f32 %v746, %v817
    %819 = vdwg.mxu0
    %v820 = vtanh.pop %v816
    %v821 = vtanh.pop %v818
    %v822 = vadd.f32 %v741, %v820
    %v823 = vadd.f32 %v742, %v821
    %v824 = vrot.slane %v279, 4
    %v825 = vrot.slane %v281, 4
    %828 = vmatprep.subr.mxu0 %v285
    %829 = vmatpush1.msra.mxu0 %v284
    %830 = vmatprep.subr.mxu0 %v287
    %831 = vmatpush1.msra.mxu0 %v286
    %832 = vmatprep.subr.mxu0 %v289
    %833 = vmatpush1.msra.mxu0 %v288
    %834 = vmatprep.subr.mxu0 %v291
    %835 = vmatpush1.msra.mxu0 %v290
    %836 = vmatprep.subr.mxu0 %v293
    %837 = vmatpush1.msra.mxu0 %v292
    %838 = vmatprep.subr.mxu0 %v295
    %839 = vmatpush1.msra.mxu0 %v294
    %840 = vmatprep.subr.mxu0 %v297
    %841 = vmatpush1.msra.mxu0 %v296
    %842 = vmatprep.subr.mxu0 %v299
    %843 = vmatpush1.msra.mxu0 %v298
    %844 = vmatprep.subr.mxu0 %v301
    %845 = vmatpush1.msra.mxu0 %v300
    %846 = vmatprep.subr.mxu0 %v303
    %847 = vmatpush1.msra.mxu0 %v302
    %848 = vmatprep.subr.mxu0 %v305
    %849 = vmatpush1.msra.mxu0 %v304
    %850 = vmatprep.subr.mxu0 %v307
    %851 = vmatpush1.msra.mxu0 %v306
    %852 = vmatprep.subr.mxu0 %v309
    %853 = vmatpush1.msra.mxu0 %v308
    %854 = vmatprep.subr.mxu0 %v311
    %855 = vmatpush1.msra.mxu0 %v310
    %856 = vmatprep.subr.mxu0 %v313
    %857 = vmatpush1.msra.mxu0 %v312
    %858 = vmatprep.subr.mxu0 %v315
    %859 = vmatpush1.msra.mxu0 %v314
    %860 = vmatprep.subr.mxu0 %v317
    %861 = vmatpush1.msra.mxu0 %v316
    %862 = vmatprep.subr.mxu0 %v319
    %863 = vmatpush1.msra.mxu0 %v318
    %864 = vmatprep.subr.mxu0 %v321
    %865 = vmatpush1.msra.mxu0 %v320
    %866 = vmatprep.subr.mxu0 %v323
    %867 = vmatpush1.msra.mxu0 %v322
    %868 = vmatprep.subr.mxu0 %v325
    %869 = vmatpush1.msra.mxu0 %v324
    %870 = vmatprep.subr.mxu0 %v327
    %871 = vmatpush1.msra.mxu0 %v326
    %872 = vmatprep.subr.mxu0 %v329
    %873 = vmatpush1.msra.mxu0 %v328
    %874 = vmatprep.subr.mxu0 %v331
    %875 = vmatpush1.msra.mxu0 %v330
    %876 = vmatprep.subr.mxu0 %v333
    %877 = vmatpush1.msra.mxu0 %v332
    %878 = vmatprep.subr.mxu0 %v335
    %879 = vmatpush1.msra.mxu0 %v334
    %880 = vmatprep.subr.mxu0 %v337
    %881 = vmatpush1.msra.mxu0 %v336
    %882 = vmatprep.subr.mxu0 %v339
    %883 = vmatpush1.msra.mxu0 %v338
    %884 = vmatprep.subr.mxu0 %v341
    %885 = vmatpush1.msra.mxu0 %v340
    %886 = vmatprep.subr.mxu0 %v343
    %887 = vmatpush1.msra.mxu0 %v342
    %888 = vmatprep.subr.mxu0 %v345
    %889 = vmatpush1.msra.mxu0 %v344
    %890 = vmatprep.subr.mxu0 %v347
    %891 = vmatpush1.msra.mxu0 %v346
    %892 = vmatprep.mubr.f32.mxu0 %v821
    %893 = vmatmul.mubr.f32.gmra.mrb[0].mxu0 %v820
    %v894 = vpop.f32.mrb[0].mxu0
    %v895 = vadd.f32 %v824, %v894
    %v896 = vpop.f32.mrb[0].mxu0
    %v897 = vadd.f32 %v825, %v896
    %898 = vdwg.mxu0
    %v899 = vtanh.pop %v895
    %v900 = vtanh.pop %v897
    %v901 = vadd.f32 %v822, %v899
    %v902 = vadd.f32 %v823, %v900
    %v903 = vrot.slane %v279, 6
    %v904 = vrot.slane %v281, 6
    %907 = vmatprep.subr.mxu0 %v285
    %908 = vmatpush1.msra.mxu0 %v284
    %909 = vmatprep.subr.mxu0 %v287
    %910 = vmatpush1.msra.mxu0 %v286
    %911 = vmatprep.subr.mxu0 %v289
    %912 = vmatpush1.msra.mxu0 %v288
    %913 = vmatprep.subr.mxu0 %v291
    %914 = vmatpush1.msra.mxu0 %v290
    %915 = vmatprep.subr.mxu0 %v293
    %916 = vmatpush1.msra.mxu0 %v292
    %917 = vmatprep.subr.mxu0 %v295
    %918 = vmatpush1.msra.mxu0 %v294
    %919 = vmatprep.subr.mxu0 %v297
    %920 = vmatpush1.msra.mxu0 %v296
    %921 = vmatprep.subr.mxu0 %v299
    %922 = vmatpush1.msra.mxu0 %v298
    %923 = vmatprep.subr.mxu0 %v301
    %924 = vmatpush1.msra.mxu0 %v300
    %925 = vmatprep.subr.mxu0 %v303
    %926 = vmatpush1.msra.mxu0 %v302
    %927 = vmatprep.subr.mxu0 %v305
    %928 = vmatpush1.msra.mxu0 %v304
    %929 = vmatprep.subr.mxu0 %v307
    %930 = vmatpush1.msra.mxu0 %v306
    %931 = vmatprep.subr.mxu0 %v309
    %932 = vmatpush1.msra.mxu0 %v308
    %933 = vmatprep.subr.mxu0 %v311
    %934 = vmatpush1.msra.mxu0 %v310
    %935 = vmatprep.subr.mxu0 %v313
    %936 = vmatpush1.msra.mxu0 %v312
    %937 = vmatprep.subr.mxu0 %v315
    %938 = vmatpush1.msra.mxu0 %v314
    %939 = vmatprep.subr.mxu0 %v317
    %940 = vmatpush1.msra.mxu0 %v316
    %941 = vmatprep.subr.mxu0 %v319
    %942 = vmatpush1.msra.mxu0 %v318
    %943 = vmatprep.subr.mxu0 %v321
    %944 = vmatpush1.msra.mxu0 %v320
    %945 = vmatprep.subr.mxu0 %v323
    %946 = vmatpush1.msra.mxu0 %v322
    %947 = vmatprep.subr.mxu0 %v325
    %948 = vmatpush1.msra.mxu0 %v324
    %949 = vmatprep.subr.mxu0 %v327
    %950 = vmatpush1.msra.mxu0 %v326
    %951 = vmatprep.subr.mxu0 %v329
    %952 = vmatpush1.msra.mxu0 %v328
    %953 = vmatprep.subr.mxu0 %v331
    %954 = vmatpush1.msra.mxu0 %v330
    %955 = vmatprep.subr.mxu0 %v333
    %956 = vmatpush1.msra.mxu0 %v332
    %957 = vmatprep.subr.mxu0 %v335
    %958 = vmatpush1.msra.mxu0 %v334
    %959 = vmatprep.subr.mxu0 %v337
    %960 = vmatpush1.msra.mxu0 %v336
    %961 = vmatprep.subr.mxu0 %v339
    %962 = vmatpush1.msra.mxu0 %v338
    %963 = vmatprep.subr.mxu0 %v341
    %964 = vmatpush1.msra.mxu0 %v340
    %965 = vmatprep.subr.mxu0 %v343
    %966 = vmatpush1.msra.mxu0 %v342
    %967 = vmatprep.subr.mxu0 %v345
    %968 = vmatpush1.msra.mxu0 %v344
    %969 = vmatprep.subr.mxu0 %v347
    %970 = vmatpush1.msra.mxu0 %v346
    %971 = vmatprep.mubr.f32.mxu0 %v900
    %972 = vmatmul.mubr.f32.gmra.mrb[0].mxu0 %v899
    %v973 = vpop.f32.mrb[0].mxu0
    %v974 = vadd.f32 %v903, %v973
    %v975 = vpop.f32.mrb[0].mxu0
    %v976 = vadd.f32 %v904, %v975
    %977 = vdwg.mxu0
    %v978 = vtanh.pop %v974
    %v979 = vtanh.pop %v976
    %v980 = vadd.f32 %v901, %v978
    %v981 = vadd.f32 %v902, %v979
    %982 = vmatprep.subr.mxu0 %v285
    %983 = vmatpush1.msra.mxu0 %v284
    %984 = vmatprep.subr.mxu0 %v287
    %985 = vmatpush1.msra.mxu0 %v286
    %986 = vmatprep.subr.mxu0 %v289
    %987 = vmatpush1.msra.mxu0 %v288
    %988 = vmatprep.subr.mxu0 %v291
    %989 = vmatpush1.msra.mxu0 %v290
    %990 = vmatprep.subr.mxu0 %v293
    %991 = vmatpush1.msra.mxu0 %v292
    %992 = vmatprep.subr.mxu0 %v295
    %993 = vmatpush1.msra.mxu0 %v294
    %994 = vmatprep.subr.mxu0 %v297
    %995 = vmatpush1.msra.mxu0 %v296
    %996 = vmatprep.subr.mxu0 %v299
    %997 = vmatpush1.msra.mxu0 %v298
    %998 = vmatprep.subr.mxu0 %v301
    %999 = vmatpush1.msra.mxu0 %v300
    %1000 = vmatprep.subr.mxu0 %v303
    %1001 = vmatpush1.msra.mxu0 %v302
    %1002 = vmatprep.subr.mxu0 %v305
    %1003 = vmatpush1.msra.mxu0 %v304
    %1004 = vmatprep.subr.mxu0 %v307
    %1005 = vmatpush1.msra.mxu0 %v306
    %1006 = vmatprep.subr.mxu0 %v309
    %1007 = vmatpush1.msra.mxu0 %v308
    %1008 = vmatprep.subr.mxu0 %v311
    %1009 = vmatpush1.msra.mxu0 %v310
    %1010 = vmatprep.subr.mxu0 %v313
    %1011 = vmatpush1.msra.mxu0 %v312
    %1012 = vmatprep.subr.mxu0 %v315
    %1013 = vmatpush1.msra.mxu0 %v314
    %1014 = vmatprep.subr.mxu0 %v317
    %1015 = vmatpush1.msra.mxu0 %v316
    %1016 = vmatprep.subr.mxu0 %v319
    %1017 = vmatpush1.msra.mxu0 %v318
    %1018 = vmatprep.subr.mxu0 %v321
    %1019 = vmatpush1.msra.mxu0 %v320
    %1020 = vmatprep.subr.mxu0 %v323
    %1021 = vmatpush1.msra.mxu0 %v322
    %1022 = vmatprep.subr.mxu0 %v325
    %1023 = vmatpush1.msra.mxu0 %v324
    %1024 = vmatprep.subr.mxu0 %v327
    %1025 = vmatpush1.msra.mxu0 %v326
    %1026 = vmatprep.subr.mxu0 %v329
    %1027 = vmatpush1.msra.mxu0 %v328
    %1028 = vmatprep.subr.mxu0 %v331
    %1029 = vmatpush1.msra.mxu0 %v330
    %1030 = vmatprep.subr.mxu0 %v333
    %1031 = vmatpush1.msra.mxu0 %v332
    %1032 = vmatprep.subr.mxu0 %v335
    %1033 = vmatpush1.msra.mxu0 %v334
    %1034 = vmatprep.subr.mxu0 %v337
    %1035 = vmatpush1.msra.mxu0 %v336
    %1036 = vmatprep.subr.mxu0 %v339
    %1037 = vmatpush1.msra.mxu0 %v338
    %1038 = vmatprep.subr.mxu0 %v341
    %1039 = vmatpush1.msra.mxu0 %v340
    %1040 = vmatprep.subr.mxu0 %v343
    %1041 = vmatpush1.msra.mxu0 %v342
    %1042 = vmatprep.subr.mxu0 %v345
    %1043 = vmatpush1.msra.mxu0 %v344
    %1044 = vmatprep.subr.mxu0 %v347
    %1045 = vmatpush1.msra.mxu0 %v346
    %1046 = vmatprep.mubr.f32.mxu0 %v979
    %1047 = vmatmul.mubr.f32.gmra.mrb[0].mxu0 %v978
    %v1048 = vpop.f32.mrb[0].mxu0
    %v1049 = vadd.f32 %v192, %v1048
    %v1050 = vpop.f32.mrb[0].mxu0
    %v1051 = vadd.f32 %v196, %v1050
    %1052 = vdwg.mxu0
    %v1053 = vtanh.pop %v1049
    %v1054 = vtanh.pop %v1051
    %v1055 = vadd.f32 %v980, %v1053
    %v1056 = vadd.f32 %v981, %v1054
    %1057 = vmatprep.subr.mxu0 %v285
    %1058 = vmatpush1.msra.mxu0 %v284
    %1059 = vmatprep.subr.mxu0 %v287
    %1060 = vmatpush1.msra.mxu0 %v286
    %1061 = vmatprep.subr.mxu0 %v289
    %1062 = vmatpush1.msra.mxu0 %v288
    %1063 = vmatprep.subr.mxu0 %v291
    %1064 = vmatpush1.msra.mxu0 %v290
    %1065 = vmatprep.subr.mxu0 %v293
    %1066 = vmatpush1.msra.mxu0 %v292
    %1067 = vmatprep.subr.mxu0 %v295
    %1068 = vmatpush1.msra.mxu0 %v294
    %1069 = vmatprep.subr.mxu0 %v297
    %1070 = vmatpush1.msra.mxu0 %v296
    %1071 = vmatprep.subr.mxu0 %v299
    %1072 = vmatpush1.msra.mxu0 %v298
    %1073 = vmatprep.subr.mxu0 %v301
    %1074 = vmatpush1.msra.mxu0 %v300
    %1075 = vmatprep.subr.mxu0 %v303
    %1076 = vmatpush1.msra.mxu0 %v302
    %1077 = vmatprep.subr.mxu0 %v305
    %1078 = vmatpush1.msra.mxu0 %v304
    %1079 = vmatprep.subr.mxu0 %v307
    %1080 = vmatpush1.msra.mxu0 %v306
    %1081 = vmatprep.subr.mxu0 %v309
    %1082 = vmatpush1.msra.mxu0 %v308
    %1083 = vmatprep.subr.mxu0 %v311
    %1084 = vmatpush1.msra.mxu0 %v310
    %1085 = vmatprep.subr.mxu0 %v313
    %1086 = vmatpush1.msra.mxu0 %v312
    %1087 = vmatprep.subr.mxu0 %v315
    %1088 = vmatpush1.msra.mxu0 %v314
    %1089 = vmatprep.subr.mxu0 %v317
    %1090 = vmatpush1.msra.mxu0 %v316
    %1091 = vmatprep.subr.mxu0 %v319
    %1092 = vmatpush1.msra.mxu0 %v318
    %1093 = vmatprep.subr.mxu0 %v321
    %1094 = vmatpush1.msra.mxu0 %v320
    %1095 = vmatprep.subr.mxu0 %v323
    %1096 = vmatpush1.msra.mxu0 %v322
    %1097 = vmatprep.subr.mxu0 %v325
    %1098 = vmatpush1.msra.mxu0 %v324
    %1099 = vmatprep.subr.mxu0 %v327
    %1100 = vmatpush1.msra.mxu0 %v326
    %1101 = vmatprep.subr.mxu0 %v329
    %1102 = vmatpush1.msra.mxu0 %v328
    %1103 = vmatprep.subr.mxu0 %v331
    %1104 = vmatpush1.msra.mxu0 %v330
    %1105 = vmatprep.subr.mxu0 %v333
    %1106 = vmatpush1.msra.mxu0 %v332
    %1107 = vmatprep.subr.mxu0 %v335
    %1108 = vmatpush1.msra.mxu0 %v334
    %1109 = vmatprep.subr.mxu0 %v337
    %1110 = vmatpush1.msra.mxu0 %v336
    %1111 = vmatprep.subr.mxu0 %v339
    %1112 = vmatpush1.msra.mxu0 %v338
    %1113 = vmatprep.subr.mxu0 %v341
    %1114 = vmatpush1.msra.mxu0 %v340
    %1115 = vmatprep.subr.mxu0 %v343
    %1116 = vmatpush1.msra.mxu0 %v342
    %1117 = vmatprep.subr.mxu0 %v345
    %1118 = vmatpush1.msra.mxu0 %v344
    %1119 = vmatprep.subr.mxu0 %v347
    %1120 = vmatpush1.msra.mxu0 %v346
    %1121 = vmatprep.mubr.f32.mxu0 %v1054
    %1122 = vmatmul.mubr.f32.gmra.mrb[0].mxu0 %v1053
    %v1123 = vpop.f32.mrb[0].mxu0
    %v1124 = vadd.f32 %v192, %v1123
    %v1125 = vpop.f32.mrb[0].mxu0
    %v1126 = vadd.f32 %v196, %v1125
    %1127 = vdwg.mxu0
    %v1128 = vtanh.pop %v1124
    %v1129 = vtanh.pop %v1126
    %v1130 = vadd.f32 %v1055, %v1128
    %v1131 = vadd.f32 %v1056, %v1129
    %1132 = vmatprep.subr.mxu0 %v285
    %1133 = vmatpush1.msra.mxu0 %v284
    %1134 = vmatprep.subr.mxu0 %v287
    %1135 = vmatpush1.msra.mxu0 %v286
    %1136 = vmatprep.subr.mxu0 %v289
    %1137 = vmatpush1.msra.mxu0 %v288
    %1138 = vmatprep.subr.mxu0 %v291
    %1139 = vmatpush1.msra.mxu0 %v290
    %1140 = vmatprep.subr.mxu0 %v293
    %1141 = vmatpush1.msra.mxu0 %v292
    %1142 = vmatprep.subr.mxu0 %v295
    %1143 = vmatpush1.msra.mxu0 %v294
    %1144 = vmatprep.subr.mxu0 %v297
    %1145 = vmatpush1.msra.mxu0 %v296
    %1146 = vmatprep.subr.mxu0 %v299
    %1147 = vmatpush1.msra.mxu0 %v298
    %1148 = vmatprep.subr.mxu0 %v301
    %1149 = vmatpush1.msra.mxu0 %v300
    %1150 = vmatprep.subr.mxu0 %v303
    %1151 = vmatpush1.msra.mxu0 %v302
    %1152 = vmatprep.subr.mxu0 %v305
    %1153 = vmatpush1.msra.mxu0 %v304
    %1154 = vmatprep.subr.mxu0 %v307
    %1155 = vmatpush1.msra.mxu0 %v306
    %1156 = vmatprep.subr.mxu0 %v309
    %1157 = vmatpush1.msra.mxu0 %v308
    %1158 = vmatprep.subr.mxu0 %v311
    %1159 = vmatpush1.msra.mxu0 %v310
    %1160 = vmatprep.subr.mxu0 %v313
    %1161 = vmatpush1.msra.mxu0 %v312
    %1162 = vmatprep.subr.mxu0 %v315
    %1163 = vmatpush1.msra.mxu0 %v314
    %1164 = vmatprep.subr.mxu0 %v317
    %1165 = vmatpush1.msra.mxu0 %v316
    %1166 = vmatprep.subr.mxu0 %v319
    %1167 = vmatpush1.msra.mxu0 %v318
    %1168 = vmatprep.subr.mxu0 %v321
    %1169 = vmatpush1.msra.mxu0 %v320
    %1170 = vmatprep.subr.mxu0 %v323
    %1171 = vmatpush1.msra.mxu0 %v322
    %1172 = vmatprep.subr.mxu0 %v325
    %1173 = vmatpush1.msra.mxu0 %v324
    %1174 = vmatprep.subr.mxu0 %v327
    %1175 = vmatpush1.msra.mxu0 %v326
    %1176 = vmatprep.subr.mxu0 %v329
    %1177 = vmatpush1.msra.mxu0 %v328
    %1178 = vmatprep.subr.mxu0 %v331
    %1179 = vmatpush1.msra.mxu0 %v330
    %1180 = vmatprep.subr.mxu0 %v333
    %1181 = vmatpush1.msra.mxu0 %v332
    %1182 = vmatprep.subr.mxu0 %v335
    %1183 = vmatpush1.msra.mxu0 %v334
    %1184 = vmatprep.subr.mxu0 %v337
    %1185 = vmatpush1.msra.mxu0 %v336
    %1186 = vmatprep.subr.mxu0 %v339
    %1187 = vmatpush1.msra.mxu0 %v338
    %1188 = vmatprep.subr.mxu0 %v341
    %1189 = vmatpush1.msra.mxu0 %v340
    %1190 = vmatprep.subr.mxu0 %v343
    %1191 = vmatpush1.msra.mxu0 %v342
    %1192 = vmatprep.subr.mxu0 %v345
    %1193 = vmatpush1.msra.mxu0 %v344
    %1194 = vmatprep.subr.mxu0 %v347
    %1195 = vmatpush1.msra.mxu0 %v346
    %1196 = vmatprep.mubr.f32.mxu0 %v1129
    %1197 = vmatmul.mubr.f32.gmra.mrb[0].mxu0 %v1128
    %v1198 = vpop.f32.mrb[0].mxu0
    %v1199 = vadd.f32 %v192, %v1198
    %v1200 = vpop.f32.mrb[0].mxu0
    %v1201 = vadd.f32 %v196, %v1200
    %1202 = vdwg.mxu0
    %v1203 = vtanh.pop %v1199
    %v1204 = vtanh.pop %v1201
    %v1205 = vadd.f32 %v1130, %v1203
    %v1206 = vadd.f32 %v1131, %v1204
    %v1209 = vcombine.low %v1205, %v1206
    %v1211 = vunpack.c.l.s4 1983009808
    %v1212 = vunpack.c.0.s8 %v1211
    %v1213 = vlaneseq
    %v1214 = vshrl.u32 %v1213, 7
    %v1215 = vsub.s32 %v1212, %v1214
    %v1216 = vrot.slane %v1209, %v1215
    %1218 = vst [vmem:[#allocation8] sm:$0xf] %v1216
    %v1219 = vld [vmem:[#allocation7] sm:$0xff]
    %v1220 = vld [vmem:[#allocation7 + $0x8] sm:$0xff]
    %v1221 = vld [vmem:[#allocation7 + $0x10] sm:$0xff]
    %v1222 = vld [vmem:[#allocation7 + $0x18] sm:$0xff]
    %v1223 = vld [vmem:[#allocation7 + $0x20] sm:$0xff]
    %v1224 = vld [vmem:[#allocation7 + $0x28] sm:$0xff]
    %v1225 = vld [vmem:[#allocation7 + $0x30] sm:$0xff]
    %v1226 = vld [vmem:[#allocation7 + $0x38] sm:$0xff]
    %v1227 = vld [vmem:[#allocation7 + $0x40] sm:$0xff]
    %v1228 = vld [vmem:[#allocation7 + $0x48] sm:$0xff]
    %v1229 = vld [vmem:[#allocation7 + $0x50] sm:$0xff]
    %v1230 = vld [vmem:[#allocation7 + $0x58] sm:$0xff]
    %v1231 = vld [vmem:[#allocation7 + $0x60] sm:$0xff]
    %v1232 = vld [vmem:[#allocation7 + $0x68] sm:$0xff]
    %v1233 = vld [vmem:[#allocation7 + $0x70] sm:$0xff]
    %v1234 = vld [vmem:[#allocation7 + $0x78] sm:$0xff]
    %v1235 = vld [vmem:[#allocation7 + $0x80] sm:$0xff]
    %v1236 = vld [vmem:[#allocation7 + $0x88] sm:$0xff]
    %v1237 = vld [vmem:[#allocation7 + $0x90] sm:$0xff]
    %v1238 = vld [vmem:[#allocation7 + $0x98] sm:$0xff]
    %v1239 = vld [vmem:[#allocation7 + $0xa0] sm:$0xff]
    %v1240 = vld [vmem:[#allocation7 + $0xa8] sm:$0xff]
    %v1241 = vld [vmem:[#allocation7 + $0xb0] sm:$0xff]
    %v1242 = vld [vmem:[#allocation7 + $0xb8] sm:$0xff]
    %v1243 = vld [vmem:[#allocation7 + $0xc0] sm:$0xff]
    %v1244 = vld [vmem:[#allocation7 + $0xc8] sm:$0xff]
    %v1245 = vld [vmem:[#allocation7 + $0xd0] sm:$0xff]
    %v1246 = vld [vmem:[#allocation7 + $0xd8] sm:$0xff]
    %v1247 = vld [vmem:[#allocation7 + $0xe0] sm:$0xff]
    %v1248 = vld [vmem:[#allocation7 + $0xe8] sm:$0xff]
    %v1249 = vld [vmem:[#allocation7 + $0xf0] sm:$0xff]
    %v1250 = vld [vmem:[#allocation7 + $0xf8] sm:$0xff]
    %v1251 = vld [vmem:[%s6] sm:$0x1]
    %v1253 = vlaneseq
    %v1254 = vshrl.u32 %v1253, 7
    %v1255 = vsub.s32 0, %v1254
    %v1256 = vrot.slane %v1251, %v1255
    %1258 = vmatprep.subr.mxu0 0.0
    %1259 = vmatpush1.msra.mxu0 %v1219
    %1260 = vmatprep.subr.mxu0 0.0
    %1261 = vmatpush1.msra.mxu0 %v1220
    %1262 = vmatprep.subr.mxu0 0.0
    %1263 = vmatpush1.msra.mxu0 %v1221
    %1264 = vmatprep.subr.mxu0 0.0
    %1265 = vmatpush1.msra.mxu0 %v1222
    %1266 = vmatprep.subr.mxu0 0.0
    %1267 = vmatpush1.msra.mxu0 %v1223
    %1268 = vmatprep.subr.mxu0 0.0
    %1269 = vmatpush1.msra.mxu0 %v1224
    %1270 = vmatprep.subr.mxu0 0.0
    %1271 = vmatpush1.msra.mxu0 %v1225
    %1272 = vmatprep.subr.mxu0 0.0
    %1273 = vmatpush1.msra.mxu0 %v1226
    %1274 = vmatprep.subr.mxu0 0.0
    %1275 = vmatpush1.msra.mxu0 %v1227
    %1276 = vmatprep.subr.mxu0 0.0
    %1277 = vmatpush1.msra.mxu0 %v1228
    %1278 = vmatprep.subr.mxu0 0.0
    %1279 = vmatpush1.msra.mxu0 %v1229
    %1280 = vmatprep.subr.mxu0 0.0
    %1281 = vmatpush1.msra.mxu0 %v1230
    %1282 = vmatprep.subr.mxu0 0.0
    %1283 = vmatpush1.msra.mxu0 %v1231
    %1284 = vmatprep.subr.mxu0 0.0
    %1285 = vmatpush1.msra.mxu0 %v1232
    %1286 = vmatprep.subr.mxu0 0.0
    %1287 = vmatpush1.msra.mxu0 %v1233
    %1288 = vmatprep.subr.mxu0 0.0
    %1289 = vmatpush1.msra.mxu0 %v1234
    %1290 = vmatprep.subr.mxu0 0.0
    %1291 = vmatpush1.msra.mxu0 %v1235
    %1292 = vmatprep.subr.mxu0 0.0
    %1293 = vmatpush1.msra.mxu0 %v1236
    %1294 = vmatprep.subr.mxu0 0.0
    %1295 = vmatpush1.msra.mxu0 %v1237
    %1296 = vmatprep.subr.mxu0 0.0
    %1297 = vmatpush1.msra.mxu0 %v1238
    %1298 = vmatprep.subr.mxu0 0.0
    %1299 = vmatpush1.msra.mxu0 %v1239
    %1300 = vmatprep.subr.mxu0 0.0
    %1301 = vmatpush1.msra.mxu0 %v1240
    %1302 = vmatprep.subr.mxu0 0.0
    %1303 = vmatpush1.msra.mxu0 %v1241
    %1304 = vmatprep.subr.mxu0 0.0
    %1305 = vmatpush1.msra.mxu0 %v1242
    %1306 = vmatprep.subr.mxu0 0.0
    %1307 = vmatpush1.msra.mxu0 %v1243
    %1308 = vmatprep.subr.mxu0 0.0
    %1309 = vmatpush1.msra.mxu0 %v1244
    %1310 = vmatprep.subr.mxu0 0.0
    %1311 = vmatpush1.msra.mxu0 %v1245
    %1312 = vmatprep.subr.mxu0 0.0
    %1313 = vmatpush1.msra.mxu0 %v1246
    %1314 = vmatprep.subr.mxu0 0.0
    %1315 = vmatpush1.msra.mxu0 %v1247
    %1316 = vmatprep.subr.mxu0 0.0
    %1317 = vmatpush1.msra.mxu0 %v1248
    %1318 = vmatprep.subr.mxu0 0.0
    %1319 = vmatpush1.msra.mxu0 %v1249
    %1320 = vmatprep.subr.mxu0 0.0
    %1321 = vmatpush1.msra.mxu0 %v1250
    %1322 = vmatprep.mubr.f32.mxu0 %v1206
    %1323 = vmatmul.mubr.f32.gmra.mrb[0].mxu0 %v1205
    %v1324 = vpop.f32.mrb[0].mxu0
    %v1325 = vadd.f32 %v1256, %v1324
    %v1326 = vpop.f32.mrb[0].mxu0
    %1327 = vdwg.mxu0
    %1328 = vst [vmem:[#allocation9] sm:$0x3] %v1325
    // Predicated region
    $region42: #{tpu_custom_call.1} parent=1 // pred_check
      _
    $region43: #{tpu_custom_call.1} parent=1 // pred_check_branch
      %1330 = sbr.rel (0) target = $region45
    $region44: #{tpu_custom_call.1} parent=1 // pred_region
      %s1332 = ssub.s32 64, 64
      %1333 = vsyncadd [#allocation4], %s1332
      %s1335 = sshll.u32 [#allocation8], 4
      %s1336 = int_to_ptr.vmem [resolvable:$true] %s1335
      %1338 = dma.vmem_to_hbm [thread:$0]  %s1336, 64, %s7, [#allocation4]
    $region45: #{tpu_custom_call.1} parent=1 // pred_fallthru
      _
    // Predicated region
    $region46: #{tpu_custom_call.1} parent=1 // pred_check
      _
    $region47: #{tpu_custom_call.1} parent=1 // pred_check_branch
      %1340 = sbr.rel (0) target = $region49
    $region48: #{tpu_custom_call.1} parent=1 // pred_region
      %s1342 = ssub.s32 32, 32
      %1343 = vsyncadd [#allocation10], %s1342
      %s1345 = sshll.u32 [#allocation9], 4
      %s1346 = int_to_ptr.vmem [resolvable:$true] %s1345
      %1348 = dma.vmem_to_hbm [thread:$0]  %s1346, 32, %s8, [#allocation10]
    $region49: #{tpu_custom_call.1} parent=1 // pred_fallthru
      _
    // Predicated region
    $region50: #{tpu_custom_call.1} parent=1 // pred_check
      _
    $region51: #{tpu_custom_call.1} parent=1 // pred_check_branch
      %1350 = sbr.rel (0) target = $region53
    $region52: #{tpu_custom_call.1} parent=1 // pred_region
      %1351 = dma.done [#allocation4], 64
    $region53: #{tpu_custom_call.1} parent=1 // pred_fallthru
      _
    // Predicated region
    $region54: #{tpu_custom_call.1} parent=1 // pred_check
      _
    $region55: #{tpu_custom_call.1} parent=1 // pred_check_branch
      %1353 = sbr.rel (0) target = $region57
    $region56: #{tpu_custom_call.1} parent=1 // pred_region
      %1354 = dma.done [#allocation10], 32
    $region57: #{tpu_custom_call.1} parent=1 // pred_fallthru
      _
    %1355 = vsyncpa [#allocation3], 1
    %1356 = vsyncpa [#allocation6], 1
    %1357 = vsyncpa [#allocation4], 1
    %1358 = vsyncpa [#allocation10], 1

</llo_original>
